<compile_context>
chip_gen: v6e
topology: v6e:2x2x1
jax: 0.10.0
libtpu: 0.0.40
codegen_flags: <defaults>
</compile_context>

<pallas_src>
import jax
import jax.numpy as jnp
from jax.experimental import pallas as pl
from jax.experimental.pallas import tpu as pltpu

_LANE = 128  # lane width: every feature dim is zero-padded to a multiple of this


def _round_up(x, m):
    return (x + m - 1) // m * m


def _sublane_for(dtype):
    """Minimum batch-tile sublane multiple for the given storage dtype."""
    itemsize = jnp.dtype(dtype).itemsize
    if itemsize >= 4:
        return 8
    if itemsize == 2:
        return 16
    return 32


def _vmem_capacity_bytes():
    try:
        return int(pltpu.get_tpu_info().vmem_capacity_bytes)
    except Exception:
        return 128 * 1024 * 1024  # v5e/v6e default


def _make_mlp_kernel(num_layers, activate):
    """Fused kernel body: refs = (x, w0, b0, w1, b1, ..., out).

    Weights are (in_pad, out_pad); biases are (1, out_pad) f32."""

    def kernel(*refs):
        x_ref = refs[0]
        out_ref = refs[-1]
        h = x_ref[...]
        for i in range(num_layers):
            w_ref = refs[1 + 2 * i]          # (in_pad_i, out_pad_i)
            b_ref = refs[2 + 2 * i]          # (1, out_pad_i), f32
            # Feed the MXU in the weights' storage dtype (bf16 or f32) and
            # accumulate in f32.
            h = jnp.dot(h.astype(w_ref.dtype), w_ref[...],
                        preferred_element_type=jnp.float32)
            h = h + b_ref[...]               # bias already f32
            if i < num_layers - 1:
                # activation only *between* linear layers, matching the
                # nn.Sequential construction in the PyTorch module
                h = activate(h)
        out_ref[...] = h.astype(out_ref.dtype)

    return kernel


def prepare_mlp_params(weights, biases, dtype=None):
    """One-time parameter prep (outside the per-call hot path):
       - transpose PyTorch-convention (out, in) weights to (in, out),
       - zero-pad every feature dim up to a multiple of 128 lanes,
       - store biases as f32 (accumulation dtype), shape (1, out_pad).
       Zero padding keeps the math exact: padded rows/cols never contribute.
       Pass dtype=jnp.bfloat16 for MXU-native weights (halves resident VMEM);
       note the activation chain is then downcast per layer, so expect bf16
       accuracy vs. an all-f32 reference."""
    wts, bss = [], []
    for w, b in zip(weights, biases):
        w = jnp.asarray(w)
        b = jnp.asarray(b)
        if dtype is not None:
            w = w.astype(dtype)
        out_d, in_d = w.shape
        in_p = _round_up(in_d, _LANE)
        out_p = _round_up(out_d, _LANE)
        w_t = jnp.zeros((in_p, out_p), w.dtype).at[:in_d, :out_d].set(w.T)
        b_p = jnp.zeros((1, out_p), jnp.float32).at[0, :out_d].set(
            b.astype(jnp.float32))
        wts.append(w_t)
        bss.append(b_p)
    return wts, bss


def mlp_forward(x, wts, bss, out_dim, activate=lambda h: h, tile_b=256,
                transcendentals_per_elem=0):
    """Fused MLP forward.

    x:       (B, input_size)
    wts/bss: outputs of prepare_mlp_params (padded / transposed)
    out_dim: true (unpadded) width of the last layer
    activate: elementwise fn applied between layers (default identity,
              matching the nn.Identity default of the PyTorch module)
    transcendentals_per_elem: EUP ops per activation element (e.g. 1 for tanh)
              -- only used for the XLA cost hint.
    """
    num_layers = len(wts)
    B, f_in = x.shape
    in_pad = wts[0].shape[0]
    out_pad = wts[-1].shape[1]

    # Batch tile: dtype-aware sublane multiple; default 256 rows to fill the
    # 256-wide MXU on v6e/v7x and amortize per-grid-step overhead.
    sublane = _sublane_for(x.dtype)
    tile_b = _round_up(max(sublane, min(tile_b, _round_up(B, sublane))), sublane)
    b_pad = _round_up(B, tile_b)

    # Only pad x when it is not already lane/tile aligned (saves an extra HBM
    # read+write pass when shapes are already clean).
    if b_pad != B or in_pad != f_in:
        x_in = jnp.zeros((b_pad, in_pad), x.dtype).at[:B, :f_in].set(x)
    else:
        x_in = x

    grid = (b_pad // tile_b,)

    # Cost hint for XLA scheduling around the kernel.
    flops = 2 * b_pad * sum(w.shape[0] * w.shape[1] for w in wts)
    transcendentals = transcendentals_per_elem * b_pad * sum(
        w.shape[1] for w in wts[:-1])
    bytes_accessed = (
        x_in.size * x_in.dtype.itemsize
        + sum(w.size * w.dtype.itemsize for w in wts)
        + sum(b.size * b.dtype.itemsize for b in bss)
        + b_pad * out_pad * x.dtype.itemsize)

    # VMEM budget:
    #   resident  = weights + biases (counted ONCE when single-buffered)
    #   io_tiles  = double-buffered x / out batch tiles
    #   act       = two live f32 activation tiles of the widest adjacent pair
    resident = (sum(w.size * w.dtype.itemsize for w in wts)
                + sum(b.size * b.dtype.itemsize for b in bss))
    io_tiles = 2 * tile_b * (in_pad + out_pad) * x.dtype.itemsize
    dims = [in_pad] + [w.shape[1] for w in wts]
    act = tile_b * max(a + b for a, b in zip(dims[:-1], dims[1:])) * 4

    # Generation-aware cap: ~56 MiB on v7x (64 MiB VMEM), ~112 MiB on v5e/v6e.
    capacity = _vmem_capacity_bytes()
    cap = capacity - max(8 * 1024 * 1024, capacity // 8)

    kernel = _make_mlp_kernel(num_layers, activate)
    out_shape = jax.ShapeDtypeStruct((b_pad, out_pad), x.dtype)
    x_spec = pl.BlockSpec((tile_b, in_pad), lambda i: (i, 0))
    out_spec = pl.BlockSpec((tile_b, out_pad), lambda i: (i, 0))

    def build_call(single_buffer_weights):
        # Weights / biases use a constant index_map -> resident in VMEM across
        # all batch-grid steps; Buffered(1) avoids allocating a useless second
        # buffer for these grid-invariant blocks.
        wb_kwargs = ({"pipeline_mode": pl.Buffered(1)}
                     if single_buffer_weights else {})
        operands = [x_in]
        in_specs = [x_spec]
        for w, b in zip(wts, bss):
            operands += [w, b]
            in_specs += [
                pl.BlockSpec(w.shape, lambda i: (0, 0), **wb_kwargs),
                pl.BlockSpec(b.shape, lambda i: (0, 0), **wb_kwargs),
            ]
        resident_mult = 1 if single_buffer_weights else 2
        vmem_limit = int(min(cap, max(32 * 1024 * 1024,
                                      resident_mult * resident + io_tiles
                                      + act + (4 << 20))))
        call = pl.pallas_call(
            kernel,
            out_shape=out_shape,
            grid=grid,
            in_specs=in_specs,
            out_specs=out_spec,
            compiler_params=pltpu.CompilerParams(
                dimension_semantics=("parallel",),
                vmem_limit_bytes=vmem_limit),
            cost_estimate=pl.CostEstimate(
                flops=flops, bytes_accessed=bytes_accessed,
                transcendentals=transcendentals),
        )
        return call, operands

    # TODO(synk): for real-sized layers on v7x (any single resident weight
    # > ~16-24 MiB) tile that layer's output dim (N tiles of 256-512) with an
    # inner pltpu.emit_pipeline and an f32 VMEM accumulator instead of keeping
    # the whole weight resident.
    try:
        call, operands = build_call(single_buffer_weights=True)
        out_padded = jax.block_until_ready(call(*operands))
    except Exception:
        # Fallback: default double-buffered specs (always supported).
        call, operands = build_call(single_buffer_weights=False)
        out_padded = call(*operands)

    if b_pad != B or out_pad != out_dim:
        return out_padded[:B, :out_dim]
    return out_padded


def init_mlp_params(key, input_size, hidden_list, dtype=jnp.float32):
    """Deterministic parameter init (uniform ~ PyTorch Linear default scale)."""
    weights, biases = [], []
    dims = [input_size] + list(hidden_list)
    for fan_in, fan_out in zip(dims[:-1], dims[1:]):
        key, wk, bk = jax.random.split(key, 3)
        bound = 1.0 / (fan_in ** 0.5)
        weights.append(jax.random.uniform(wk, (fan_out, fan_in), dtype,
                                          minval=-bound, maxval=bound))
        biases.append(jax.random.uniform(bk, (fan_out,), dtype,
                                         minval=-bound, maxval=bound))
    return weights, biases


def mlp_reference(x, weights, biases, activate=lambda h: h):
    h = x.astype(jnp.float32)
    n = len(weights)
    for i, (w, b) in enumerate(zip(weights, biases)):
        h = h @ w.T.astype(jnp.float32) + b.astype(jnp.float32)
        if i < n - 1:
            h = activate(h)
    return h.astype(x.dtype)


if __name__ == "__main__":
    key = jax.random.PRNGKey(0)

    batch = 512                 # 2 grid steps with the default tile_b=256
    input_size = 32
    hidden_list = [64, 32, 16]

    key, xk, pk = jax.random.split(key, 3)
    x = jax.random.normal(xk, (batch, input_size), jnp.float32)
    weights, biases = init_mlp_params(pk, input_size, hidden_list)

    # One-time parameter prep (transpose + lane padding + f32 bias) outside
    # the hot path.
    wts, bss = prepare_mlp_params(weights, biases)

    # 1) Default activation (nn.Identity in the PyTorch module).
    out = mlp_forward(x, wts, bss, out_dim=hidden_list[-1])
    out = jax.block_until_ready(out)
    ref = mlp_reference(x, weights, biases)
    assert out.shape == (batch, hidden_list[-1]), out.shape
    assert jnp.allclose(out, ref, atol=1e-4, rtol=1e-4), (
        float(jnp.max(jnp.abs(out - ref))))

    # 2) ReLU between layers (activate_func=nn.ReLU equivalent).
    relu = lambda h: jnp.maximum(h, 0.0)
    out_r = mlp_forward(x, wts, bss, out_dim=hidden_list[-1], activate=relu)
    out_r = jax.block_until_ready(out_r)
    ref_r = mlp_reference(x, weights, biases, activate=relu)
    assert jnp.allclose(out_r, ref_r, atol=1e-4, rtol=1e-4), (
        float(jnp.max(jnp.abs(out_r - ref_r))))

    print("KERNEL_OK")
</pallas_src>

<mosaic_0001>
module attributes {stable_mosaic.version = 11 : i64} {
  func.func @kernel(%arg0: i32, %arg1: memref<256x128xf32, #tpu.memory_space<vmem>>, %arg2: memref<128x128xf32, #tpu.memory_space<vmem>>, %arg3: memref<1x128xf32, #tpu.memory_space<vmem>>, %arg4: memref<128x128xf32, #tpu.memory_space<vmem>>, %arg5: memref<1x128xf32, #tpu.memory_space<vmem>>, %arg6: memref<128x128xf32, #tpu.memory_space<vmem>>, %arg7: memref<1x128xf32, #tpu.memory_space<vmem>>, %arg8: memref<256x128xf32, #tpu.memory_space<vmem>>) attributes {dimension_semantics = [#tpu.dimension_semantics<parallel>], iteration_bounds = array<i64: 2>, scalar_prefetch = 0 : i64, scratch_operands = 0 : i64, tpu.core_type = #tpu.core_type<tc>, window_params = [{transform_indices = @transform_0, window_bounds = array<i64: 256, 128>}, {pipeline_mode = #tpu.pipeline_mode<synchronous>, transform_indices = @transform_1, window_bounds = array<i64: 128, 128>}, {pipeline_mode = #tpu.pipeline_mode<synchronous>, transform_indices = @transform_2, window_bounds = array<i64: 1, 128>}, {pipeline_mode = #tpu.pipeline_mode<synchronous>, transform_indices = @transform_3, window_bounds = array<i64: 128, 128>}, {pipeline_mode = #tpu.pipeline_mode<synchronous>, transform_indices = @transform_4, window_bounds = array<i64: 1, 128>}, {pipeline_mode = #tpu.pipeline_mode<synchronous>, transform_indices = @transform_5, window_bounds = array<i64: 128, 128>}, {pipeline_mode = #tpu.pipeline_mode<synchronous>, transform_indices = @transform_6, window_bounds = array<i64: 1, 128>}, {transform_indices = @transform_7, window_bounds = array<i64: 256, 128>}]} {
    %c0 = arith.constant 0 : index
    %c0_0 = arith.constant 0 : index
    %0 = vector.load %arg1[%c0, %c0_0] : memref<256x128xf32, #tpu.memory_space<vmem>>, vector<256x128xf32>
    %c0_1 = arith.constant 0 : index
    %c0_2 = arith.constant 0 : index
    %1 = vector.load %arg2[%c0_1, %c0_2] : memref<128x128xf32, #tpu.memory_space<vmem>>, vector<128x128xf32>
    %cst = arith.constant dense<0.000000e+00> : vector<256x128xf32>
    %2 = tpu.matmul %0, %1, %cst {dimension_numbers = #tpu.dot_dimension_numbers<[1], [0], [0], [1], [0, 0, 1, 1], [], []>} : vector<256x128xf32>, vector<128x128xf32>, vector<256x128xf32> -> vector<256x128xf32>
    %c0_3 = arith.constant 0 : index
    %c0_4 = arith.constant 0 : index
    %3 = vector.load %arg3[%c0_3, %c0_4] : memref<1x128xf32, #tpu.memory_space<vmem>>, vector<1x128xf32>
    %4 = vector.broadcast %3 : vector<1x128xf32> to vector<256x128xf32>
    %5 = arith.addf %2, %4 : vector<256x128xf32>
    %c0_5 = arith.constant 0 : index
    %c0_6 = arith.constant 0 : index
    %6 = vector.load %arg4[%c0_5, %c0_6] : memref<128x128xf32, #tpu.memory_space<vmem>>, vector<128x128xf32>
    %cst_7 = arith.constant dense<0.000000e+00> : vector<256x128xf32>
    %7 = tpu.matmul %5, %6, %cst_7 {dimension_numbers = #tpu.dot_dimension_numbers<[1], [0], [0], [1], [0, 0, 1, 1], [], []>} : vector<256x128xf32>, vector<128x128xf32>, vector<256x128xf32> -> vector<256x128xf32>
    %c0_8 = arith.constant 0 : index
    %c0_9 = arith.constant 0 : index
    %8 = vector.load %arg5[%c0_8, %c0_9] : memref<1x128xf32, #tpu.memory_space<vmem>>, vector<1x128xf32>
    %9 = vector.broadcast %8 : vector<1x128xf32> to vector<256x128xf32>
    %10 = arith.addf %7, %9 : vector<256x128xf32>
    %c0_10 = arith.constant 0 : index
    %c0_11 = arith.constant 0 : index
    %11 = vector.load %arg6[%c0_10, %c0_11] : memref<128x128xf32, #tpu.memory_space<vmem>>, vector<128x128xf32>
    %cst_12 = arith.constant dense<0.000000e+00> : vector<256x128xf32>
    %12 = tpu.matmul %10, %11, %cst_12 {dimension_numbers = #tpu.dot_dimension_numbers<[1], [0], [0], [1], [0, 0, 1, 1], [], []>} : vector<256x128xf32>, vector<128x128xf32>, vector<256x128xf32> -> vector<256x128xf32>
    %c0_13 = arith.constant 0 : index
    %c0_14 = arith.constant 0 : index
    %13 = vector.load %arg7[%c0_13, %c0_14] : memref<1x128xf32, #tpu.memory_space<vmem>>, vector<1x128xf32>
    %14 = vector.broadcast %13 : vector<1x128xf32> to vector<256x128xf32>
    %15 = arith.addf %12, %14 : vector<256x128xf32>
    %c0_15 = arith.constant 0 : index
    %c0_16 = arith.constant 0 : index
    %16 = vector.load %arg8[%c0_15, %c0_16] : memref<256x128xf32, #tpu.memory_space<vmem>>, vector<256x128xf32>
    tpu.vector_store %arg8[%c0_15, %c0_16], %15 {strides = array<i32>} : memref<256x128xf32, #tpu.memory_space<vmem>>, vector<256x128xf32>,
    return
  }
  func.func @transform_0(%arg0: i32) -> (i32, i32) {
    %c0_i32 = arith.constant 0 : i32
    %c0_i32_0 = arith.constant 0 : i32
    return %arg0, %c0_i32 : i32, i32
  }
  func.func @transform_1(%arg0: i32) -> (i32, i32) {
    %c0_i32 = arith.constant 0 : i32
    %c0_i32_0 = arith.constant 0 : i32
    %c0_i32_1 = arith.constant 0 : i32
    return %c0_i32, %c0_i32_0 : i32, i32
  }
  func.func @transform_2(%arg0: i32) -> (i32, i32) {
    %c0_i32 = arith.constant 0 : i32
    %c0_i32_0 = arith.constant 0 : i32
    %c0_i32_1 = arith.constant 0 : i32
    return %c0_i32, %c0_i32_0 : i32, i32
  }
  func.func @transform_3(%arg0: i32) -> (i32, i32) {
    %c0_i32 = arith.constant 0 : i32
    %c0_i32_0 = arith.constant 0 : i32
    %c0_i32_1 = arith.constant 0 : i32
    return %c0_i32, %c0_i32_0 : i32, i32
  }
  func.func @transform_4(%arg0: i32) -> (i32, i32) {
    %c0_i32 = arith.constant 0 : i32
    %c0_i32_0 = arith.constant 0 : i32
    %c0_i32_1 = arith.constant 0 : i32
    return %c0_i32, %c0_i32_0 : i32, i32
  }
  func.func @transform_5(%arg0: i32) -> (i32, i32) {
    %c0_i32 = arith.constant 0 : i32
    %c0_i32_0 = arith.constant 0 : i32
    %c0_i32_1 = arith.constant 0 : i32
    return %c0_i32, %c0_i32_0 : i32, i32
  }
  func.func @transform_6(%arg0: i32) -> (i32, i32) {
    %c0_i32 = arith.constant 0 : i32
    %c0_i32_0 = arith.constant 0 : i32
    %c0_i32_1 = arith.constant 0 : i32
    return %c0_i32, %c0_i32_0 : i32, i32
  }
  func.func @transform_7(%arg0: i32) -> (i32, i32) {
    %c0_i32 = arith.constant 0 : i32
    %c0_i32_0 = arith.constant 0 : i32
    return %arg0, %c0_i32 : i32, i32
  }
}

module attributes {stable_mosaic.version = 11 : i64} {
  func.func @kernel(%arg0: i32, %arg1: memref<256x128xf32, #tpu.memory_space<vmem>>, %arg2: memref<128x128xf32, #tpu.memory_space<vmem>>, %arg3: memref<1x128xf32, #tpu.memory_space<vmem>>, %arg4: memref<128x128xf32, #tpu.memory_space<vmem>>, %arg5: memref<1x128xf32, #tpu.memory_space<vmem>>, %arg6: memref<128x128xf32, #tpu.memory_space<vmem>>, %arg7: memref<1x128xf32, #tpu.memory_space<vmem>>, %arg8: memref<256x128xf32, #tpu.memory_space<vmem>>) attributes {dimension_semantics = [#tpu.dimension_semantics<parallel>], iteration_bounds = array<i64: 2>, scalar_prefetch = 0 : i64, scratch_operands = 0 : i64, tpu.core_type = #tpu.core_type<tc>, window_params = [{transform_indices = @transform_0, window_bounds = array<i64: 256, 128>}, {pipeline_mode = #tpu.pipeline_mode<synchronous>, transform_indices = @transform_1, window_bounds = array<i64: 128, 128>}, {pipeline_mode = #tpu.pipeline_mode<synchronous>, transform_indices = @transform_2, window_bounds = array<i64: 1, 128>}, {pipeline_mode = #tpu.pipeline_mode<synchronous>, transform_indices = @transform_3, window_bounds = array<i64: 128, 128>}, {pipeline_mode = #tpu.pipeline_mode<synchronous>, transform_indices = @transform_4, window_bounds = array<i64: 1, 128>}, {pipeline_mode = #tpu.pipeline_mode<synchronous>, transform_indices = @transform_5, window_bounds = array<i64: 128, 128>}, {pipeline_mode = #tpu.pipeline_mode<synchronous>, transform_indices = @transform_6, window_bounds = array<i64: 1, 128>}, {transform_indices = @transform_7, window_bounds = array<i64: 256, 128>}]} {
    %c0 = arith.constant 0 : index
    %c0_0 = arith.constant 0 : index
    %0 = vector.load %arg1[%c0, %c0_0] : memref<256x128xf32, #tpu.memory_space<vmem>>, vector<256x128xf32>
    %c0_1 = arith.constant 0 : index
    %c0_2 = arith.constant 0 : index
    %1 = vector.load %arg2[%c0_1, %c0_2] : memref<128x128xf32, #tpu.memory_space<vmem>>, vector<128x128xf32>
    %cst = arith.constant dense<0.000000e+00> : vector<256x128xf32>
    %2 = tpu.matmul %0, %1, %cst {dimension_numbers = #tpu.dot_dimension_numbers<[1], [0], [0], [1], [0, 0, 1, 1], [], []>} : vector<256x128xf32>, vector<128x128xf32>, vector<256x128xf32> -> vector<256x128xf32>
    %c0_3 = arith.constant 0 : index
    %c0_4 = arith.constant 0 : index
    %3 = vector.load %arg3[%c0_3, %c0_4] : memref<1x128xf32, #tpu.memory_space<vmem>>, vector<1x128xf32>
    %4 = vector.broadcast %3 : vector<1x128xf32> to vector<256x128xf32>
    %5 = arith.addf %2, %4 : vector<256x128xf32>
    %c0_5 = arith.constant 0 : index
    %c0_6 = arith.constant 0 : index
    %6 = vector.load %arg4[%c0_5, %c0_6] : memref<128x128xf32, #tpu.memory_space<vmem>>, vector<128x128xf32>
    %cst_7 = arith.constant dense<0.000000e+00> : vector<256x128xf32>
    %7 = tpu.matmul %5, %6, %cst_7 {dimension_numbers = #tpu.dot_dimension_numbers<[1], [0], [0], [1], [0, 0, 1, 1], [], []>} : vector<256x128xf32>, vector<128x128xf32>, vector<256x128xf32> -> vector<256x128xf32>
    %c0_8 = arith.constant 0 : index
    %c0_9 = arith.constant 0 : index
    %8 = vector.load %arg5[%c0_8, %c0_9] : memref<1x128xf32, #tpu.memory_space<vmem>>, vector<1x128xf32>
    %9 = vector.broadcast %8 : vector<1x128xf32> to vector<256x128xf32>
    %10 = arith.addf %7, %9 : vector<256x128xf32>
    %c0_10 = arith.constant 0 : index
    %c0_11 = arith.constant 0 : index
    %11 = vector.load %arg6[%c0_10, %c0_11] : memref<128x128xf32, #tpu.memory_space<vmem>>, vector<128x128xf32>
    %cst_12 = arith.constant dense<0.000000e+00> : vector<256x128xf32>
    %12 = tpu.matmul %10, %11, %cst_12 {dimension_numbers = #tpu.dot_dimension_numbers<[1], [0], [0], [1], [0, 0, 1, 1], [], []>} : vector<256x128xf32>, vector<128x128xf32>, vector<256x128xf32> -> vector<256x128xf32>
    %c0_13 = arith.constant 0 : index
    %c0_14 = arith.constant 0 : index
    %13 = vector.load %arg7[%c0_13, %c0_14] : memref<1x128xf32, #tpu.memory_space<vmem>>, vector<1x128xf32>
    %14 = vector.broadcast %13 : vector<1x128xf32> to vector<256x128xf32>
    %15 = arith.addf %12, %14 : vector<256x128xf32>
    %c0_15 = arith.constant 0 : index
    %c0_16 = arith.constant 0 : index
    %16 = vector.load %arg8[%c0_15, %c0_16] : memref<256x128xf32, #tpu.memory_space<vmem>>, vector<256x128xf32>
    tpu.vector_store %arg8[%c0_15, %c0_16], %15 {strides = array<i32>} : memref<256x128xf32, #tpu.memory_space<vmem>>, vector<256x128xf32>,
    return
  }
  func.func @transform_0(%arg0: i32) -> (i32, i32) {
    %c0_i32 = arith.constant 0 : i32
    %c0_i32_0 = arith.constant 0 : i32
    return %arg0, %c0_i32 : i32, i32
  }
  func.func @transform_1(%arg0: i32) -> (i32, i32) {
    %c0_i32 = arith.constant 0 : i32
    %c0_i32_0 = arith.constant 0 : i32
    %c0_i32_1 = arith.constant 0 : i32
    return %c0_i32, %c0_i32_0 : i32, i32
  }
  func.func @transform_2(%arg0: i32) -> (i32, i32) {
    %c0_i32 = arith.constant 0 : i32
    %c0_i32_0 = arith.constant 0 : i32
    %c0_i32_1 = arith.constant 0 : i32
    return %c0_i32, %c0_i32_0 : i32, i32
  }
  func.func @transform_3(%arg0: i32) -> (i32, i32) {
    %c0_i32 = arith.constant 0 : i32
    %c0_i32_0 = arith.constant 0 : i32
    %c0_i32_1 = arith.constant 0 : i32
    return %c0_i32, %c0_i32_0 : i32, i32
  }
  func.func @transform_4(%arg0: i32) -> (i32, i32) {
    %c0_i32 = arith.constant 0 : i32
    %c0_i32_0 = arith.constant 0 : i32
    %c0_i32_1 = arith.constant 0 : i32
    return %c0_i32, %c0_i32_0 : i32, i32
  }
  func.func @transform_5(%arg0: i32) -> (i32, i32) {
    %c0_i32 = arith.constant 0 : i32
    %c0_i32_0 = arith.constant 0 : i32
    %c0_i32_1 = arith.constant 0 : i32
    return %c0_i32, %c0_i32_0 : i32, i32
  }
  func.func @transform_6(%arg0: i32) -> (i32, i32) {
    %c0_i32 = arith.constant 0 : i32
    %c0_i32_0 = arith.constant 0 : i32
    %c0_i32_1 = arith.constant 0 : i32
    return %c0_i32, %c0_i32_0 : i32, i32
  }
  func.func @transform_7(%arg0: i32) -> (i32, i32) {
    %c0_i32 = arith.constant 0 : i32
    %c0_i32_0 = arith.constant 0 : i32
    return %arg0, %c0_i32 : i32, i32
  }
}

</mosaic_0001>

<llo_original>
// kernel: tpu_custom_call.1
$region0: #{tpu_custom_call.1}
  #allocation0 [shape = 'u32[]', space=smem, size = 0x4, offset = 0x4, fixed_abs, tag = 'smem constant byte address 0x4 - core index']
  #allocation1 [shape = 'u32[144,128]{1,0:T(1,128)}', space=vmem, size = 0x12000, scoped, tag = 'internal scratch']
  %s0 = inlined_call_operand.hbm [shape: f32[512,128], index: 0, kind: input, shape index: {}]
  %s1 = inlined_call_operand.hbm [shape: f32[128,128], index: 1, kind: input, shape index: {}]
  %s2 = inlined_call_operand.vmem [shape: f32[1,128], index: 2, kind: input, shape index: {}]
  %s3 = inlined_call_operand.hbm [shape: f32[128,128], index: 3, kind: input, shape index: {}]
  %s4 = inlined_call_operand.vmem [shape: f32[1,128], index: 4, kind: input, shape index: {}]
  %s5 = inlined_call_operand.hbm [shape: f32[128,128], index: 5, kind: input, shape index: {}]
  %s6 = inlined_call_operand.vmem [shape: f32[1,128], index: 6, kind: input, shape index: {}]
  %s7 = inlined_call_operand.hbm [shape: f32[512,128], index: 7, kind: output, shape index: {}]
  %s8 = sld [smem:[#allocation0]]
  $region77: #{tpu_custom_call.1} parent=0
    _
  %s10 = ssub.s32 1, %s8
  %s11 = scalar_select 0, %s10, %s8
  $region1: #{tpu_custom_call.1} parent=0
    #allocation2 [shape = 'u8[262144]{0}', space=vmem, size = 0x40000, scoped, tag = 'input window, operand 0']
    #allocation3 [shape = 's32[2]{0}', space=sflag, size = 0x8, scoped, tag = 'scoped memory for tpu_custom_call.1']
    #allocation4 [shape = 's32[2]{0}', space=sflag, size = 0x8, scoped, tag = 'scoped memory for tpu_custom_call.1']
    #allocation5 [shape = 'u8[65536]{0}', space=vmem, size = 0x10000, scoped, tag = 'input window, operand 1, single buffered']
    #allocation6 [shape = 's32[1]{0}', space=sflag, size = 0x4, scoped, tag = 'scoped memory for tpu_custom_call.1']
    #allocation7 [shape = 'u8[65536]{0}', space=vmem, size = 0x10000, scoped, tag = 'input window, operand 3, single buffered']
    #allocation8 [shape = 'u8[65536]{0}', space=vmem, size = 0x10000, scoped, tag = 'input window, operand 5, single buffered']
    #allocation9 [shape = 's32[1]{0}', space=sflag, size = 0x4, scoped, tag = 'scoped memory for tpu_custom_call.1']
    #allocation10 [shape = 'u8[262144]{0}', space=vmem, size = 0x40000, scoped, tag = 'output window, operand 0']
    %12 = vsyncpa [#allocation3], 0
    %s13 = scalar_lea.sflag [#allocation3], 1
    %14 = vsyncpa %s13, 0
    %15 = vsyncpa [#allocation6], 0
    %16 = vsyncpa [#allocation9], 0
    %17 = vsyncpa [#allocation4], 0
    %s18 = scalar_lea.sflag [#allocation4], 1
    %19 = vsyncpa %s18, 0
    loop: start=0, step=1, limit=4
    $region2: #{tpu_custom_call.1} parent=1 // loop_pre_header
      _
    $region3: #{tpu_custom_call.1} parent=1 // loop_header
      %s21 = sphi 0, %s25
      %p22 = scmp.ge.s32.totalorder %s21, 4
      %s31 = sphi 0, %s33
      %s34 = sphi 0, %s31
      %s35 = sphi 0, %s34
      %s51 = sphi 0, %s35
      %s55 = sphi 0, %s55
      %s57 = sphi 0, %s55
      %s58 = sphi 0, %s57
      %s72 = sphi 0, %s58
      %s76 = sphi 0, %s76
      %s78 = sphi 0, %s76
      %s79 = sphi 0, %s78
      %s93 = sphi 0, %s79
      %s97 = sphi 0, %s97
      %s99 = sphi 0, %s97
      %s100 = sphi 0, %s99
      %s114 = sphi 0, %s100
      %s118 = sphi 0, %s118
      %s120 = sphi 0, %s118
      %s121 = sphi 0, %s120
      %s135 = sphi 0, %s121
      %s139 = sphi 0, %s139
      %s141 = sphi 0, %s139
      %s142 = sphi 0, %s141
      %s156 = sphi 0, %s142
      %s160 = sphi 0, %s160
      %s162 = sphi 0, %s160
      %s163 = sphi 0, %s162
      %s177 = sphi 0, %s163
      %s183 = sphi 0, %s185
      %s186 = sphi 0, %s183
      %s187 = sphi 0, %s186
      %s203 = sphi 0, %s187
    $region4: #{tpu_custom_call.1} parent=1 // loop_header_branch
      %24 = sbr.rel (%p22) target = $region8
    $region5: #{tpu_custom_call.1} parent=1 // loop_body
      %s26 = ssub.s32 %s21, 1
      %s27 = ssub.s32 %s21, 2
      %s28 = sadd.s32 %s21, 1
      %s29 = ssub.s32 %s21, %s28
      %p30 = scmp.eq.s32.totalorder %s29, 0
      %s32 = sadd.s32 %s31, 1
      %s33 = scalar_select %p30, %s31, %s32
      %p36 = pneg %p30
      %p37 = scmp.eq.s32.totalorder %s21, 1
      %p38 = por %p36, %p37
      %p39 = scmp.ne.s32.totalorder %s31, %s34
      %p40 = scmp.eq.s32.totalorder %s21, 0
      %p41 = por %p39, %p40
      %p42 = scmp.ne.s32.totalorder %s31, %s34
      %p43 = scmp.eq.s32.totalorder %s26, 1
      %p44 = por %p42, %p43
      %p45 = scmp.ne.s32.totalorder %s34, %s35
      %p46 = scmp.eq.s32.totalorder %s26, 0
      %p47 = por %p45, %p46
      %p48 = scmp.ne.s32.totalorder %s34, %s35
      %p49 = scmp.eq.s32.totalorder %s27, 1
      %p50 = por %p48, %p49
      %p52 = scmp.ne.s32.totalorder %s35, %s51
      %p53 = scmp.eq.s32.totalorder %s27, 0
      %p54 = por %p52, %p53
      %s56 = sadd.s32 %s55, 1
      %p59 = scmp.eq.s32.totalorder %s21, 1
      %p60 = scmp.ne.s32.totalorder %s55, %s57
      %p61 = scmp.eq.s32.totalorder %s21, 0
      %p62 = por %p60, %p61
      %p63 = scmp.ne.s32.totalorder %s55, %s57
      %p64 = scmp.eq.s32.totalorder %s26, 1
      %p65 = por %p63, %p64
      %p66 = scmp.ne.s32.totalorder %s57, %s58
      %p67 = scmp.eq.s32.totalorder %s26, 0
      %p68 = por %p66, %p67
      %p69 = scmp.ne.s32.totalorder %s57, %s58
      %p70 = scmp.eq.s32.totalorder %s27, 1
      %p71 = por %p69, %p70
      %p73 = scmp.ne.s32.totalorder %s58, %s72
      %p74 = scmp.eq.s32.totalorder %s27, 0
      %p75 = por %p73, %p74
      %s77 = sadd.s32 %s76, 1
      %p80 = scmp.eq.s32.totalorder %s21, 1
      %p81 = scmp.ne.s32.totalorder %s76, %s78
      %p82 = scmp.eq.s32.totalorder %s21, 0
      %p83 = por %p81, %p82
      %p84 = scmp.ne.s32.totalorder %s76, %s78
      %p85 = scmp.eq.s32.totalorder %s26, 1
      %p86 = por %p84, %p85
      %p87 = scmp.ne.s32.totalorder %s78, %s79
      %p88 = scmp.eq.s32.totalorder %s26, 0
      %p89 = por %p87, %p88
      %p90 = scmp.ne.s32.totalorder %s78, %s79
      %p91 = scmp.eq.s32.totalorder %s27, 1
      %p92 = por %p90, %p91
      %p94 = scmp.ne.s32.totalorder %s79, %s93
      %p95 = scmp.eq.s32.totalorder %s27, 0
      %p96 = por %p94, %p95
      %s98 = sadd.s32 %s97, 1
      %p101 = scmp.eq.s32.totalorder %s21, 1
      %p102 = scmp.ne.s32.totalorder %s97, %s99
      %p103 = scmp.eq.s32.totalorder %s21, 0
      %p104 = por %p102, %p103
      %p105 = scmp.ne.s32.totalorder %s97, %s99
      %p106 = scmp.eq.s32.totalorder %s26, 1
      %p107 = por %p105, %p106
      %p108 = scmp.ne.s32.totalorder %s99, %s100
      %p109 = scmp.eq.s32.totalorder %s26, 0
      %p110 = por %p108, %p109
      %p111 = scmp.ne.s32.totalorder %s99, %s100
      %p112 = scmp.eq.s32.totalorder %s27, 1
      %p113 = por %p111, %p112
      %p115 = scmp.ne.s32.totalorder %s100, %s114
      %p116 = scmp.eq.s32.totalorder %s27, 0
      %p117 = por %p115, %p116
      %s119 = sadd.s32 %s118, 1
      %p122 = scmp.eq.s32.totalorder %s21, 1
      %p123 = scmp.ne.s32.totalorder %s118, %s120
      %p124 = scmp.eq.s32.totalorder %s21, 0
      %p125 = por %p123, %p124
      %p126 = scmp.ne.s32.totalorder %s118, %s120
      %p127 = scmp.eq.s32.totalorder %s26, 1
      %p128 = por %p126, %p127
      %p129 = scmp.ne.s32.totalorder %s120, %s121
      %p130 = scmp.eq.s32.totalorder %s26, 0
      %p131 = por %p129, %p130
      %p132 = scmp.ne.s32.totalorder %s120, %s121
      %p133 = scmp.eq.s32.totalorder %s27, 1
      %p134 = por %p132, %p133
      %p136 = scmp.ne.s32.totalorder %s121, %s135
      %p137 = scmp.eq.s32.totalorder %s27, 0
      %p138 = por %p136, %p137
      %s140 = sadd.s32 %s139, 1
      %p143 = scmp.eq.s32.totalorder %s21, 1
      %p144 = scmp.ne.s32.totalorder %s139, %s141
      %p145 = scmp.eq.s32.totalorder %s21, 0
      %p146 = por %p144, %p145
      %p147 = scmp.ne.s32.totalorder %s139, %s141
      %p148 = scmp.eq.s32.totalorder %s26, 1
      %p149 = por %p147, %p148
      %p150 = scmp.ne.s32.totalorder %s141, %s142
      %p151 = scmp.eq.s32.totalorder %s26, 0
      %p152 = por %p150, %p151
      %p153 = scmp.ne.s32.totalorder %s141, %s142
      %p154 = scmp.eq.s32.totalorder %s27, 1
      %p155 = por %p153, %p154
      %p157 = scmp.ne.s32.totalorder %s142, %s156
      %p158 = scmp.eq.s32.totalorder %s27, 0
      %p159 = por %p157, %p158
      %s161 = sadd.s32 %s160, 1
      %p164 = scmp.eq.s32.totalorder %s21, 1
      %p165 = scmp.ne.s32.totalorder %s160, %s162
      %p166 = scmp.eq.s32.totalorder %s21, 0
      %p167 = por %p165, %p166
      %p168 = scmp.ne.s32.totalorder %s160, %s162
      %p169 = scmp.eq.s32.totalorder %s26, 1
      %p170 = por %p168, %p169
      %p171 = scmp.ne.s32.totalorder %s162, %s163
      %p172 = scmp.eq.s32.totalorder %s26, 0
      %p173 = por %p171, %p172
      %p174 = scmp.ne.s32.totalorder %s162, %s163
      %p175 = scmp.eq.s32.totalorder %s27, 1
      %p176 = por %p174, %p175
      %p178 = scmp.ne.s32.totalorder %s163, %s177
      %p179 = scmp.eq.s32.totalorder %s27, 0
      %p180 = por %p178, %p179
      %s181 = ssub.s32 %s21, %s28
      %p182 = scmp.eq.s32.totalorder %s181, 0
      %s184 = sadd.s32 %s183, 1
      %s185 = scalar_select %p182, %s183, %s184
      %p188 = pneg %p182
      %p189 = scmp.eq.s32.totalorder %s21, 1
      %p190 = por %p188, %p189
      %p191 = scmp.ne.s32.totalorder %s183, %s186
      %p192 = scmp.eq.s32.totalorder %s21, 0
      %p193 = por %p191, %p192
      %p194 = scmp.ne.s32.totalorder %s183, %s186
      %p195 = scmp.eq.s32.totalorder %s26, 1
      %p196 = por %p194, %p195
      %p197 = scmp.ne.s32.totalorder %s186, %s187
      %p198 = scmp.eq.s32.totalorder %s26, 0
      %p199 = por %p197, %p198
      %p200 = scmp.ne.s32.totalorder %s186, %s187
      %p201 = scmp.eq.s32.totalorder %s27, 1
      %p202 = por %p200, %p201
      %p204 = scmp.ne.s32.totalorder %s187, %s203
      %p205 = scmp.eq.s32.totalorder %s27, 0
      %p206 = por %p204, %p205
      %p207 = scmp.le.s32.totalorder 1, %s21
      %p208 = scmp.lt.s32.totalorder %s21, 3
      %p209 = pnand %p207, %p208
      %p210 = pneg %p209
      // Predicated region
      $region9: #{tpu_custom_call.1} parent=5 // pred_check
        _
      $region10: #{tpu_custom_call.1} parent=5 // pred_check_branch
        %212 = sbr.rel (%p209) target = $region12
      $region11: #{tpu_custom_call.1} parent=5 // pred_region
        %s213 = ssub.s32 %s21, 1
        // Predicated region
        $region13: #{tpu_custom_call.1} parent=11 // pred_check
          %p214 = pneg %p68
        $region14: #{tpu_custom_call.1} parent=11 // pred_check_branch
          %216 = sbr.rel (%p214) target = $region16
        $region15: #{tpu_custom_call.1} parent=11 // pred_region
          %s218 = ssub.s32 2048, 2048
          %219 = vsyncadd [#allocation6], %s218
          %s220 = sshll.u32 [#allocation5], 4
          %s221 = int_to_ptr.vmem [resolvable:$true] %s220
          %226 = dma.hbm_to_vmem [thread:$0]  %s1, 2048, %s221, [#allocation6], 128, 128, 8
        $region16: #{tpu_custom_call.1} parent=11 // pred_fallthru
          _
        // Predicated region
        $region17: #{tpu_custom_call.1} parent=11 // pred_check
          %p227 = pneg %p89
        $region18: #{tpu_custom_call.1} parent=11 // pred_check_branch
          %229 = sbr.rel (%p227) target = $region20
        $region19: #{tpu_custom_call.1} parent=11 // pred_region
          _
        $region20: #{tpu_custom_call.1} parent=11 // pred_fallthru
          _
        // Predicated region
        $region21: #{tpu_custom_call.1} parent=11 // pred_check
          %p230 = pneg %p110
        $region22: #{tpu_custom_call.1} parent=11 // pred_check_branch
          %232 = sbr.rel (%p230) target = $region24
        $region23: #{tpu_custom_call.1} parent=11 // pred_region
          %s234 = ssub.s32 2048, 2048
          %235 = vsyncadd [#allocation6], %s234
          %s236 = sshll.u32 [#allocation7], 4
          %s237 = int_to_ptr.vmem [resolvable:$true] %s236
          %242 = dma.hbm_to_vmem [thread:$0]  %s3, 2048, %s237, [#allocation6], 128, 128, 8
        $region24: #{tpu_custom_call.1} parent=11 // pred_fallthru
          _
        // Predicated region
        $region25: #{tpu_custom_call.1} parent=11 // pred_check
          %p243 = pneg %p131
        $region26: #{tpu_custom_call.1} parent=11 // pred_check_branch
          %245 = sbr.rel (%p243) target = $region28
        $region27: #{tpu_custom_call.1} parent=11 // pred_region
          _
        $region28: #{tpu_custom_call.1} parent=11 // pred_fallthru
          _
        // Predicated region
        $region29: #{tpu_custom_call.1} parent=11 // pred_check
          %p246 = pneg %p152
        $region30: #{tpu_custom_call.1} parent=11 // pred_check_branch
          %248 = sbr.rel (%p246) target = $region32
        $region31: #{tpu_custom_call.1} parent=11 // pred_region
          %s250 = ssub.s32 2048, 2048
          %251 = vsyncadd [#allocation9], %s250
          %s252 = sshll.u32 [#allocation8], 4
          %s253 = int_to_ptr.vmem [resolvable:$true] %s252
          %258 = dma.hbm_to_vmem [thread:$0]  %s5, 2048, %s253, [#allocation9], 128, 128, 8
        $region32: #{tpu_custom_call.1} parent=11 // pred_fallthru
          _
        // Predicated region
        $region33: #{tpu_custom_call.1} parent=11 // pred_check
          %p259 = pneg %p173
        $region34: #{tpu_custom_call.1} parent=11 // pred_check_branch
          %261 = sbr.rel (%p259) target = $region36
        $region35: #{tpu_custom_call.1} parent=11 // pred_region
          _
        $region36: #{tpu_custom_call.1} parent=11 // pred_fallthru
          _
      $region12: #{tpu_custom_call.1} parent=5 // pred_fallthru
        _
      %p262 = scmp.lt.s32.totalorder %s21, 2
      // Predicated region
      $region37: #{tpu_custom_call.1} parent=5 // pred_check
        %p263 = pneg %p262
      $region38: #{tpu_custom_call.1} parent=5 // pred_check_branch
        %265 = sbr.rel (%p263) target = $region40
      $region39: #{tpu_custom_call.1} parent=5 // pred_region
        // Predicated region
        $region41: #{tpu_custom_call.1} parent=39 // pred_check
          %p266 = pneg %p41
        $region42: #{tpu_custom_call.1} parent=39 // pred_check_branch
          %268 = sbr.rel (%p266) target = $region44
        $region43: #{tpu_custom_call.1} parent=39 // pred_region
          %s269 = sand.u32 %s31, 1
          %s270 = scalar_lea.sflag [#allocation3], %s269
          %s271 = sand.u32 %s31, 1
          %s272 = smul.addr %s271, 256
          %s273 = scalar_lea.vmem [#allocation2], %s272
          %s274 = smul.u32 32, %s21
          %s276 = ssub.s32 4096, 4096
          %277 = vsyncadd %s270, %s276
          %s278 = smul.addr %s274, 128
          %s279 = scalar_lea.hbm %s0, %s278
          %s280 = sshll.u32 %s273, 4
          %s281 = int_to_ptr.vmem [resolvable:$true] %s280
          %286 = dma.hbm_to_vmem [thread:$0]  %s279, 4096, %s281, %s270, 128, 128, 8
        $region44: #{tpu_custom_call.1} parent=39 // pred_fallthru
          _
      $region40: #{tpu_custom_call.1} parent=5 // pred_fallthru
        _
      %p287 = scmp.le.s32.totalorder 1, %s21
      %p288 = scmp.lt.s32.totalorder %s21, 3
      %p289 = pnand %p287, %p288
      %p290 = pneg %p289
      // Predicated region
      $region45: #{tpu_custom_call.1} parent=5 // pred_check
        _
      $region46: #{tpu_custom_call.1} parent=5 // pred_check_branch
        %292 = sbr.rel (%p289) target = $region48
      $region47: #{tpu_custom_call.1} parent=5 // pred_region
        %s293 = ssub.s32 %s21, 1
        %s294 = sand.u32 %s34, 1
        %s295 = scalar_lea.sflag [#allocation3], %s294
        %s296 = sand.u32 %s34, 1
        %s297 = smul.addr %s296, 256
        %s298 = scalar_lea.vmem [#allocation2], %s297
        // Predicated region
        $region49: #{tpu_custom_call.1} parent=47 // pred_check
          %p299 = pneg %p47
        $region50: #{tpu_custom_call.1} parent=47 // pred_check_branch
          %301 = sbr.rel (%p299) target = $region52
        $region51: #{tpu_custom_call.1} parent=47 // pred_region
          %302 = dma.done %s295, 4096
        $region52: #{tpu_custom_call.1} parent=47 // pred_fallthru
          _
        // Predicated region
        $region53: #{tpu_custom_call.1} parent=47 // pred_check
          %p303 = pneg %p68
        $region54: #{tpu_custom_call.1} parent=47 // pred_check_branch
          %305 = sbr.rel (%p303) target = $region56
        $region55: #{tpu_custom_call.1} parent=47 // pred_region
          %306 = dma.done [#allocation6], 2048
        $region56: #{tpu_custom_call.1} parent=47 // pred_fallthru
          _
        // Predicated region
        $region57: #{tpu_custom_call.1} parent=47 // pred_check
          %p307 = pneg %p110
        $region58: #{tpu_custom_call.1} parent=47 // pred_check_branch
          %309 = sbr.rel (%p307) target = $region60
        $region59: #{tpu_custom_call.1} parent=47 // pred_region
          %310 = dma.done [#allocation6], 2048
        $region60: #{tpu_custom_call.1} parent=47 // pred_fallthru
          _
        // Predicated region
        $region61: #{tpu_custom_call.1} parent=47 // pred_check
          %p311 = pneg %p152
        $region62: #{tpu_custom_call.1} parent=47 // pred_check_branch
          %313 = sbr.rel (%p311) target = $region64
        $region63: #{tpu_custom_call.1} parent=47 // pred_region
          %314 = dma.done [#allocation9], 2048
        $region64: #{tpu_custom_call.1} parent=47 // pred_fallthru
          _
        %s315 = sand.u32 %s34, 1
        %s316 = scalar_lea.sflag [#allocation3], %s315
        %s317 = sand.u32 %s34, 1
        %s318 = smul.addr %s317, 256
        %s319 = scalar_lea.vmem [#allocation2], %s318
        %p320 = pneg %p47
        %p321 = pneg %p44
        %p322 = pneg %p68
        %p323 = pneg %p65
        %p324 = pneg %p89
        %p325 = pneg %p86
        %p326 = pneg %p110
        %p327 = pneg %p107
        %p328 = pneg %p131
        %p329 = pneg %p128
        %p330 = pneg %p152
        %p331 = pneg %p149
        %p332 = pneg %p173
        %p333 = pneg %p170
        %p334 = pneg %p199
        %p335 = pneg %p196
        %s336 = sand.u32 %s186, 1
        %s337 = scalar_lea.sflag [#allocation4], %s336
        %s338 = sand.u32 %s186, 1
        %s339 = smul.addr %s338, 256
        %s340 = scalar_lea.vmem [#allocation10], %s339
        %s341 = smul.u32 32, %s26
        %s342 = smul.u32 32, %s26
        %v343 = vld [vmem:[%s298] sm:$0xff]
        %v344 = vld [vmem:[%s298 + $0x8] sm:$0xff]
        %v345 = vld [vmem:[%s298 + $0x10] sm:$0xff]
        %v346 = vld [vmem:[%s298 + $0x18] sm:$0xff]
        %v347 = vld [vmem:[%s298 + $0x20] sm:$0xff]
        %v348 = vld [vmem:[%s298 + $0x28] sm:$0xff]
        %v349 = vld [vmem:[%s298 + $0x30] sm:$0xff]
        %v350 = vld [vmem:[%s298 + $0x38] sm:$0xff]
        %v351 = vld [vmem:[%s298 + $0x40] sm:$0xff]
        %v352 = vld [vmem:[%s298 + $0x48] sm:$0xff]
        %v353 = vld [vmem:[%s298 + $0x50] sm:$0xff]
        %v354 = vld [vmem:[%s298 + $0x58] sm:$0xff]
        %v355 = vld [vmem:[%s298 + $0x60] sm:$0xff]
        %v356 = vld [vmem:[%s298 + $0x68] sm:$0xff]
        %v357 = vld [vmem:[%s298 + $0x70] sm:$0xff]
        %v358 = vld [vmem:[%s298 + $0x78] sm:$0xff]
        %v359 = vld [vmem:[%s298 + $0x80] sm:$0xff]
        %v360 = vld [vmem:[%s298 + $0x88] sm:$0xff]
        %v361 = vld [vmem:[%s298 + $0x90] sm:$0xff]
        %v362 = vld [vmem:[%s298 + $0x98] sm:$0xff]
        %v363 = vld [vmem:[%s298 + $0xa0] sm:$0xff]
        %v364 = vld [vmem:[%s298 + $0xa8] sm:$0xff]
        %v365 = vld [vmem:[%s298 + $0xb0] sm:$0xff]
        %v366 = vld [vmem:[%s298 + $0xb8] sm:$0xff]
        %v367 = vld [vmem:[%s298 + $0xc0] sm:$0xff]
        %v368 = vld [vmem:[%s298 + $0xc8] sm:$0xff]
        %v369 = vld [vmem:[%s298 + $0xd0] sm:$0xff]
        %v370 = vld [vmem:[%s298 + $0xd8] sm:$0xff]
        %v371 = vld [vmem:[%s298 + $0xe0] sm:$0xff]
        %v372 = vld [vmem:[%s298 + $0xe8] sm:$0xff]
        %v373 = vld [vmem:[%s298 + $0xf0] sm:$0xff]
        %v374 = vld [vmem:[%s298 + $0xf8] sm:$0xff]
        %v375 = vld [vmem:[#allocation5] sm:$0xff]
        %v376 = vld [vmem:[#allocation5 + $0x8] sm:$0xff]
        %v377 = vld [vmem:[#allocation5 + $0x10] sm:$0xff]
        %v378 = vld [vmem:[#allocation5 + $0x18] sm:$0xff]
        %v379 = vld [vmem:[#allocation5 + $0x20] sm:$0xff]
        %v380 = vld [vmem:[#allocation5 + $0x28] sm:$0xff]
        %v381 = vld [vmem:[#allocation5 + $0x30] sm:$0xff]
        %v382 = vld [vmem:[#allocation5 + $0x38] sm:$0xff]
        %v383 = vld [vmem:[#allocation5 + $0x40] sm:$0xff]
        %v384 = vld [vmem:[#allocation5 + $0x48] sm:$0xff]
        %v385 = vld [vmem:[#allocation5 + $0x50] sm:$0xff]
        %v386 = vld [vmem:[#allocation5 + $0x58] sm:$0xff]
        %v387 = vld [vmem:[#allocation5 + $0x60] sm:$0xff]
        %v388 = vld [vmem:[#allocation5 + $0x68] sm:$0xff]
        %v389 = vld [vmem:[#allocation5 + $0x70] sm:$0xff]
        %v390 = vld [vmem:[#allocation5 + $0x78] sm:$0xff]
        %v391 = vld [vmem:[%s2] sm:$0x1]
        %v393 = vlaneseq
        %v394 = vshrl.u32 %v393, 7
        %v395 = vsub.s32 0, %v394
        %v396 = vrot.slane %v391, %v395
        %398 = vmatprep.subr.mxu0 0.0
        %399 = vmatpush1.msra.mxu0 %v390
        %400 = vmatprep.subr.mxu0 0.0
        %401 = vmatpush1.msra.mxu0 %v389
        %402 = vmatprep.subr.mxu0 0.0
        %403 = vmatpush1.msra.mxu0 %v388
        %404 = vmatprep.subr.mxu0 0.0
        %405 = vmatpush1.msra.mxu0 %v387
        %406 = vmatprep.subr.mxu0 0.0
        %407 = vmatpush1.msra.mxu0 %v386
        %408 = vmatprep.subr.mxu0 0.0
        %409 = vmatpush1.msra.mxu0 %v385
        %410 = vmatprep.subr.mxu0 0.0
        %411 = vmatpush1.msra.mxu0 %v384
        %412 = vmatprep.subr.mxu0 0.0
        %413 = vmatpush1.msra.mxu0 %v383
        %414 = vmatprep.subr.mxu0 0.0
        %415 = vmatpush1.msra.mxu0 %v382
        %416 = vmatprep.subr.mxu0 0.0
        %417 = vmatpush1.msra.mxu0 %v381
        %418 = vmatprep.subr.mxu0 0.0
        %419 = vmatpush1.msra.mxu0 %v380
        %420 = vmatprep.subr.mxu0 0.0
        %421 = vmatpush1.msra.mxu0 %v379
        %422 = vmatprep.subr.mxu0 0.0
        %423 = vmatpush1.msra.mxu0 %v378
        %424 = vmatprep.subr.mxu0 0.0
        %425 = vmatpush1.msra.mxu0 %v377
        %426 = vmatprep.subr.mxu0 0.0
        %427 = vmatpush1.msra.mxu0 %v376
        %428 = vmatprep.subr.mxu0 0.0
        %429 = vmatpush1.msra.mxu0 %v375
        %430 = vmatprep.subr.mxu0 0.0
        %431 = vmatpush2.msra.mxu0 0.0
        %432 = vmatprep.subr.mxu0 0.0
        %433 = vmatpush2.msra.mxu0 0.0
        %434 = vmatprep.subr.mxu0 0.0
        %435 = vmatpush2.msra.mxu0 0.0
        %436 = vmatprep.subr.mxu0 0.0
        %437 = vmatpush2.msra.mxu0 0.0
        %438 = vmatprep.subr.mxu0 0.0
        %439 = vmatpush2.msra.mxu0 0.0
        %440 = vmatprep.subr.mxu0 0.0
        %441 = vmatpush2.msra.mxu0 0.0
        %442 = vmatprep.subr.mxu0 0.0
        %443 = vmatpush2.msra.mxu0 0.0
        %444 = vmatprep.subr.mxu0 0.0
        %445 = vmatpush2.msra.mxu0 0.0
        %446 = vmatprep.subr.mxu0 0.0
        %447 = vmatpush2.msra.mxu0 0.0
        %448 = vmatprep.subr.mxu0 0.0
        %449 = vmatpush2.msra.mxu0 0.0
        %450 = vmatprep.subr.mxu0 0.0
        %451 = vmatpush2.msra.mxu0 0.0
        %452 = vmatprep.subr.mxu0 0.0
        %453 = vmatpush2.msra.mxu0 0.0
        %454 = vmatprep.subr.mxu0 0.0
        %455 = vmatpush2.msra.mxu0 0.0
        %456 = vmatprep.subr.mxu0 0.0
        %457 = vmatpush2.msra.mxu0 0.0
        %458 = vmatprep.subr.mxu0 0.0
        %459 = vmatpush2.msra.mxu0 0.0
        %460 = vmatprep.subr.mxu0 0.0
        %461 = vmatpush2.msra.mxu0 0.0
        %462 = vmatprep.mubr.f32.mxu0 0.0
        %463 = vmatmul.mubr.f32.gmra.mxu0 %v343
        %v464 = vpop.f32.mrf.mxu0
        %v465 = vadd.f32 %v396, %v464
        %v466 = vpop.f32.mrf.mxu0
        %467 = vmatprep.mubr.f32.mxu0 0.0
        %468 = vmatmul.mubr.f32.gmra.mxu0 %v344
        %v469 = vpop.f32.mrf.mxu0
        %v470 = vadd.f32 %v396, %v469
        %v471 = vpop.f32.mrf.mxu0
        %472 = vmatprep.mubr.f32.mxu0 0.0
        %473 = vmatmul.mubr.f32.gmra.mxu0 %v345
        %v474 = vpop.f32.mrf.mxu0
        %v475 = vadd.f32 %v396, %v474
        %v476 = vpop.f32.mrf.mxu0
        %477 = vmatprep.mubr.f32.mxu0 0.0
        %478 = vmatmul.mubr.f32.gmra.mxu0 %v346
        %v479 = vpop.f32.mrf.mxu0
        %v480 = vadd.f32 %v396, %v479
        %v481 = vpop.f32.mrf.mxu0
        %482 = vmatprep.mubr.f32.mxu0 0.0
        %483 = vmatmul.mubr.f32.gmra.mxu0 %v347
        %v484 = vpop.f32.mrf.mxu0
        %v485 = vadd.f32 %v396, %v484
        %v486 = vpop.f32.mrf.mxu0
        %487 = vmatprep.mubr.f32.mxu0 0.0
        %488 = vmatmul.mubr.f32.gmra.mxu0 %v348
        %v489 = vpop.f32.mrf.mxu0
        %v490 = vadd.f32 %v396, %v489
        %v491 = vpop.f32.mrf.mxu0
        %492 = vmatprep.mubr.f32.mxu0 0.0
        %493 = vmatmul.mubr.f32.gmra.mxu0 %v349
        %v494 = vpop.f32.mrf.mxu0
        %v495 = vadd.f32 %v396, %v494
        %v496 = vpop.f32.mrf.mxu0
        %497 = vmatprep.mubr.f32.mxu0 0.0
        %498 = vmatmul.mubr.f32.gmra.mxu0 %v350
        %v499 = vpop.f32.mrf.mxu0
        %v500 = vadd.f32 %v396, %v499
        %v501 = vpop.f32.mrf.mxu0
        %502 = vmatprep.mubr.f32.mxu0 0.0
        %503 = vmatmul.mubr.f32.gmra.mxu0 %v351
        %v504 = vpop.f32.mrf.mxu0
        %v505 = vadd.f32 %v396, %v504
        %v506 = vpop.f32.mrf.mxu0
        %507 = vmatprep.mubr.f32.mxu0 0.0
        %508 = vmatmul.mubr.f32.gmra.mxu0 %v352
        %v509 = vpop.f32.mrf.mxu0
        %v510 = vadd.f32 %v396, %v509
        %v511 = vpop.f32.mrf.mxu0
        %512 = vmatprep.mubr.f32.mxu0 0.0
        %513 = vmatmul.mubr.f32.gmra.mxu0 %v353
        %v514 = vpop.f32.mrf.mxu0
        %v515 = vadd.f32 %v396, %v514
        %v516 = vpop.f32.mrf.mxu0
        %517 = vmatprep.mubr.f32.mxu0 0.0
        %518 = vmatmul.mubr.f32.gmra.mxu0 %v354
        %v519 = vpop.f32.mrf.mxu0
        %v520 = vadd.f32 %v396, %v519
        %v521 = vpop.f32.mrf.mxu0
        %522 = vmatprep.mubr.f32.mxu0 0.0
        %523 = vmatmul.mubr.f32.gmra.mxu0 %v355
        %v524 = vpop.f32.mrf.mxu0
        %v525 = vadd.f32 %v396, %v524
        %v526 = vpop.f32.mrf.mxu0
        %527 = vmatprep.mubr.f32.mxu0 0.0
        %528 = vmatmul.mubr.f32.gmra.mxu0 %v356
        %v529 = vpop.f32.mrf.mxu0
        %v530 = vadd.f32 %v396, %v529
        %v531 = vpop.f32.mrf.mxu0
        %532 = vmatprep.mubr.f32.mxu0 0.0
        %533 = vmatmul.mubr.f32.gmra.mxu0 %v357
        %v534 = vpop.f32.mrf.mxu0
        %v535 = vadd.f32 %v396, %v534
        %v536 = vpop.f32.mrf.mxu0
        %537 = vmatprep.mubr.f32.mxu0 0.0
        %538 = vmatmul.mubr.f32.gmra.mxu0 %v358
        %v539 = vpop.f32.mrf.mxu0
        %v540 = vadd.f32 %v396, %v539
        %v541 = vpop.f32.mrf.mxu0
        %542 = vmatprep.mubr.f32.mxu0 0.0
        %543 = vmatmul.mubr.f32.gmra.mxu0 %v359
        %v544 = vpop.f32.mrf.mxu0
        %v545 = vadd.f32 %v396, %v544
        %v546 = vpop.f32.mrf.mxu0
        %547 = vmatprep.mubr.f32.mxu0 0.0
        %548 = vmatmul.mubr.f32.gmra.mxu0 %v360
        %v549 = vpop.f32.mrf.mxu0
        %v550 = vadd.f32 %v396, %v549
        %v551 = vpop.f32.mrf.mxu0
        %552 = vmatprep.mubr.f32.mxu0 0.0
        %553 = vmatmul.mubr.f32.gmra.mxu0 %v361
        %v554 = vpop.f32.mrf.mxu0
        %v555 = vadd.f32 %v396, %v554
        %v556 = vpop.f32.mrf.mxu0
        %557 = vmatprep.mubr.f32.mxu0 0.0
        %558 = vmatmul.mubr.f32.gmra.mxu0 %v362
        %v559 = vpop.f32.mrf.mxu0
        %v560 = vadd.f32 %v396, %v559
        %v561 = vpop.f32.mrf.mxu0
        %562 = vmatprep.mubr.f32.mxu0 0.0
        %563 = vmatmul.mubr.f32.gmra.mxu0 %v363
        %v564 = vpop.f32.mrf.mxu0
        %v565 = vadd.f32 %v396, %v564
        %v566 = vpop.f32.mrf.mxu0
        %567 = vmatprep.mubr.f32.mxu0 0.0
        %568 = vmatmul.mubr.f32.gmra.mxu0 %v364
        %v569 = vpop.f32.mrf.mxu0
        %v570 = vadd.f32 %v396, %v569
        %v571 = vpop.f32.mrf.mxu0
        %572 = vmatprep.mubr.f32.mxu0 0.0
        %573 = vmatmul.mubr.f32.gmra.mxu0 %v365
        %v574 = vpop.f32.mrf.mxu0
        %v575 = vadd.f32 %v396, %v574
        %v576 = vpop.f32.mrf.mxu0
        %577 = vmatprep.mubr.f32.mxu0 0.0
        %578 = vmatmul.mubr.f32.gmra.mxu0 %v366
        %v579 = vpop.f32.mrf.mxu0
        %v580 = vadd.f32 %v396, %v579
        %v581 = vpop.f32.mrf.mxu0
        %582 = vmatprep.mubr.f32.mxu0 0.0
        %583 = vmatmul.mubr.f32.gmra.mxu0 %v367
        %v584 = vpop.f32.mrf.mxu0
        %v585 = vadd.f32 %v396, %v584
        %v586 = vpop.f32.mrf.mxu0
        %587 = vmatprep.mubr.f32.mxu0 0.0
        %588 = vmatmul.mubr.f32.gmra.mxu0 %v368
        %v589 = vpop.f32.mrf.mxu0
        %v590 = vadd.f32 %v396, %v589
        %v591 = vpop.f32.mrf.mxu0
        %592 = vmatprep.mubr.f32.mxu0 0.0
        %593 = vmatmul.mubr.f32.gmra.mxu0 %v369
        %v594 = vpop.f32.mrf.mxu0
        %v595 = vadd.f32 %v396, %v594
        %v596 = vpop.f32.mrf.mxu0
        %597 = vmatprep.mubr.f32.mxu0 0.0
        %598 = vmatmul.mubr.f32.gmra.mxu0 %v370
        %v599 = vpop.f32.mrf.mxu0
        %v600 = vadd.f32 %v396, %v599
        %v601 = vpop.f32.mrf.mxu0
        %602 = vmatprep.mubr.f32.mxu0 0.0
        %603 = vmatmul.mubr.f32.gmra.mxu0 %v371
        %v604 = vpop.f32.mrf.mxu0
        %v605 = vadd.f32 %v396, %v604
        %v606 = vpop.f32.mrf.mxu0
        %607 = vmatprep.mubr.f32.mxu0 0.0
        %608 = vmatmul.mubr.f32.gmra.mxu0 %v372
        %v609 = vpop.f32.mrf.mxu0
        %v610 = vadd.f32 %v396, %v609
        %v611 = vpop.f32.mrf.mxu0
        %612 = vmatprep.mubr.f32.mxu0 0.0
        %613 = vmatmul.mubr.f32.gmra.mxu0 %v373
        %v614 = vpop.f32.mrf.mxu0
        %v615 = vadd.f32 %v396, %v614
        %v616 = vpop.f32.mrf.mxu0
        %617 = vmatprep.mubr.f32.mxu0 0.0
        %618 = vmatmul.mubr.f32.gmra.mxu0 %v374
        %v619 = vpop.f32.mrf.mxu0
        %v620 = vadd.f32 %v396, %v619
        %v621 = vpop.f32.mrf.mxu0
        %622 = vdwg.mxu0
        %v623 = vld [vmem:[#allocation7] sm:$0xff]
        %v624 = vld [vmem:[#allocation7 + $0x8] sm:$0xff]
        %v625 = vld [vmem:[#allocation7 + $0x10] sm:$0xff]
        %v626 = vld [vmem:[#allocation7 + $0x18] sm:$0xff]
        %v627 = vld [vmem:[#allocation7 + $0x20] sm:$0xff]
        %v628 = vld [vmem:[#allocation7 + $0x28] sm:$0xff]
        %v629 = vld [vmem:[#allocation7 + $0x30] sm:$0xff]
        %v630 = vld [vmem:[#allocation7 + $0x38] sm:$0xff]
        %v631 = vld [vmem:[#allocation7 + $0x40] sm:$0xff]
        %v632 = vld [vmem:[#allocation7 + $0x48] sm:$0xff]
        %v633 = vld [vmem:[#allocation7 + $0x50] sm:$0xff]
        %v634 = vld [vmem:[#allocation7 + $0x58] sm:$0xff]
        %v635 = vld [vmem:[#allocation7 + $0x60] sm:$0xff]
        %v636 = vld [vmem:[#allocation7 + $0x68] sm:$0xff]
        %v637 = vld [vmem:[#allocation7 + $0x70] sm:$0xff]
        %v638 = vld [vmem:[#allocation7 + $0x78] sm:$0xff]
        %v639 = vld [vmem:[%s4] sm:$0x1]
        %v641 = vlaneseq
        %v642 = vshrl.u32 %v641, 7
        %v643 = vsub.s32 0, %v642
        %v644 = vrot.slane %v639, %v643
        %646 = vmatprep.subr.mxu0 0.0
        %647 = vmatpush1.msra.mxu0 %v638
        %648 = vmatprep.subr.mxu0 0.0
        %649 = vmatpush1.msra.mxu0 %v637
        %650 = vmatprep.subr.mxu0 0.0
        %651 = vmatpush1.msra.mxu0 %v636
        %652 = vmatprep.subr.mxu0 0.0
        %653 = vmatpush1.msra.mxu0 %v635
        %654 = vmatprep.subr.mxu0 0.0
        %655 = vmatpush1.msra.mxu0 %v634
        %656 = vmatprep.subr.mxu0 0.0
        %657 = vmatpush1.msra.mxu0 %v633
        %658 = vmatprep.subr.mxu0 0.0
        %659 = vmatpush1.msra.mxu0 %v632
        %660 = vmatprep.subr.mxu0 0.0
        %661 = vmatpush1.msra.mxu0 %v631
        %662 = vmatprep.subr.mxu0 0.0
        %663 = vmatpush1.msra.mxu0 %v630
        %664 = vmatprep.subr.mxu0 0.0
        %665 = vmatpush1.msra.mxu0 %v629
        %666 = vmatprep.subr.mxu0 0.0
        %667 = vmatpush1.msra.mxu0 %v628
        %668 = vmatprep.subr.mxu0 0.0
        %669 = vmatpush1.msra.mxu0 %v627
        %670 = vmatprep.subr.mxu0 0.0
        %671 = vmatpush1.msra.mxu0 %v626
        %672 = vmatprep.subr.mxu0 0.0
        %673 = vmatpush1.msra.mxu0 %v625
        %674 = vmatprep.subr.mxu0 0.0
        %675 = vmatpush1.msra.mxu0 %v624
        %676 = vmatprep.subr.mxu0 0.0
        %677 = vmatpush1.msra.mxu0 %v623
        %678 = vmatprep.subr.mxu0 0.0
        %679 = vmatpush2.msra.mxu0 0.0
        %680 = vmatprep.subr.mxu0 0.0
        %681 = vmatpush2.msra.mxu0 0.0
        %682 = vmatprep.subr.mxu0 0.0
        %683 = vmatpush2.msra.mxu0 0.0
        %684 = vmatprep.subr.mxu0 0.0
        %685 = vmatpush2.msra.mxu0 0.0
        %686 = vmatprep.subr.mxu0 0.0
        %687 = vmatpush2.msra.mxu0 0.0
        %688 = vmatprep.subr.mxu0 0.0
        %689 = vmatpush2.msra.mxu0 0.0
        %690 = vmatprep.subr.mxu0 0.0
        %691 = vmatpush2.msra.mxu0 0.0
        %692 = vmatprep.subr.mxu0 0.0
        %693 = vmatpush2.msra.mxu0 0.0
        %694 = vmatprep.subr.mxu0 0.0
        %695 = vmatpush2.msra.mxu0 0.0
        %696 = vmatprep.subr.mxu0 0.0
        %697 = vmatpush2.msra.mxu0 0.0
        %698 = vmatprep.subr.mxu0 0.0
        %699 = vmatpush2.msra.mxu0 0.0
        %700 = vmatprep.subr.mxu0 0.0
        %701 = vmatpush2.msra.mxu0 0.0
        %702 = vmatprep.subr.mxu0 0.0
        %703 = vmatpush2.msra.mxu0 0.0
        %704 = vmatprep.subr.mxu0 0.0
        %705 = vmatpush2.msra.mxu0 0.0
        %706 = vmatprep.subr.mxu0 0.0
        %707 = vmatpush2.msra.mxu0 0.0
        %708 = vmatprep.subr.mxu0 0.0
        %709 = vmatpush2.msra.mxu0 0.0
        %710 = vmatprep.mubr.f32.mxu0 0.0
        %711 = vmatmul.mubr.f32.gmra.mxu0 %v465
        %v712 = vpop.f32.mrf.mxu0
        %v713 = vadd.f32 %v644, %v712
        %v714 = vpop.f32.mrf.mxu0
        %715 = vmatprep.mubr.f32.mxu0 0.0
        %716 = vmatmul.mubr.f32.gmra.mxu0 %v470
        %v717 = vpop.f32.mrf.mxu0
        %v718 = vadd.f32 %v644, %v717
        %v719 = vpop.f32.mrf.mxu0
        %720 = vmatprep.mubr.f32.mxu0 0.0
        %721 = vmatmul.mubr.f32.gmra.mxu0 %v475
        %v722 = vpop.f32.mrf.mxu0
        %v723 = vadd.f32 %v644, %v722
        %v724 = vpop.f32.mrf.mxu0
        %725 = vmatprep.mubr.f32.mxu0 0.0
        %726 = vmatmul.mubr.f32.gmra.mxu0 %v480
        %v727 = vpop.f32.mrf.mxu0
        %v728 = vadd.f32 %v644, %v727
        %v729 = vpop.f32.mrf.mxu0
        %730 = vmatprep.mubr.f32.mxu0 0.0
        %731 = vmatmul.mubr.f32.gmra.mxu0 %v485
        %v732 = vpop.f32.mrf.mxu0
        %v733 = vadd.f32 %v644, %v732
        %v734 = vpop.f32.mrf.mxu0
        %735 = vmatprep.mubr.f32.mxu0 0.0
        %736 = vmatmul.mubr.f32.gmra.mxu0 %v490
        %v737 = vpop.f32.mrf.mxu0
        %v738 = vadd.f32 %v644, %v737
        %v739 = vpop.f32.mrf.mxu0
        %740 = vmatprep.mubr.f32.mxu0 0.0
        %741 = vmatmul.mubr.f32.gmra.mxu0 %v495
        %v742 = vpop.f32.mrf.mxu0
        %v743 = vadd.f32 %v644, %v742
        %v744 = vpop.f32.mrf.mxu0
        %745 = vmatprep.mubr.f32.mxu0 0.0
        %746 = vmatmul.mubr.f32.gmra.mxu0 %v500
        %v747 = vpop.f32.mrf.mxu0
        %v748 = vadd.f32 %v644, %v747
        %v749 = vpop.f32.mrf.mxu0
        %750 = vmatprep.mubr.f32.mxu0 0.0
        %751 = vmatmul.mubr.f32.gmra.mxu0 %v505
        %v752 = vpop.f32.mrf.mxu0
        %v753 = vadd.f32 %v644, %v752
        %v754 = vpop.f32.mrf.mxu0
        %755 = vmatprep.mubr.f32.mxu0 0.0
        %756 = vmatmul.mubr.f32.gmra.mxu0 %v510
        %v757 = vpop.f32.mrf.mxu0
        %v758 = vadd.f32 %v644, %v757
        %v759 = vpop.f32.mrf.mxu0
        %760 = vmatprep.mubr.f32.mxu0 0.0
        %761 = vmatmul.mubr.f32.gmra.mxu0 %v515
        %v762 = vpop.f32.mrf.mxu0
        %v763 = vadd.f32 %v644, %v762
        %v764 = vpop.f32.mrf.mxu0
        %765 = vmatprep.mubr.f32.mxu0 0.0
        %766 = vmatmul.mubr.f32.gmra.mxu0 %v520
        %v767 = vpop.f32.mrf.mxu0
        %v768 = vadd.f32 %v644, %v767
        %v769 = vpop.f32.mrf.mxu0
        %770 = vmatprep.mubr.f32.mxu0 0.0
        %771 = vmatmul.mubr.f32.gmra.mxu0 %v525
        %v772 = vpop.f32.mrf.mxu0
        %v773 = vadd.f32 %v644, %v772
        %v774 = vpop.f32.mrf.mxu0
        %775 = vmatprep.mubr.f32.mxu0 0.0
        %776 = vmatmul.mubr.f32.gmra.mxu0 %v530
        %v777 = vpop.f32.mrf.mxu0
        %v778 = vadd.f32 %v644, %v777
        %v779 = vpop.f32.mrf.mxu0
        %780 = vmatprep.mubr.f32.mxu0 0.0
        %781 = vmatmul.mubr.f32.gmra.mxu0 %v535
        %v782 = vpop.f32.mrf.mxu0
        %v783 = vadd.f32 %v644, %v782
        %v784 = vpop.f32.mrf.mxu0
        %785 = vmatprep.mubr.f32.mxu0 0.0
        %786 = vmatmul.mubr.f32.gmra.mxu0 %v540
        %v787 = vpop.f32.mrf.mxu0
        %v788 = vadd.f32 %v644, %v787
        %v789 = vpop.f32.mrf.mxu0
        %790 = vmatprep.mubr.f32.mxu0 0.0
        %791 = vmatmul.mubr.f32.gmra.mxu0 %v545
        %v792 = vpop.f32.mrf.mxu0
        %v793 = vadd.f32 %v644, %v792
        %v794 = vpop.f32.mrf.mxu0
        %795 = vmatprep.mubr.f32.mxu0 0.0
        %796 = vmatmul.mubr.f32.gmra.mxu0 %v550
        %v797 = vpop.f32.mrf.mxu0
        %v798 = vadd.f32 %v644, %v797
        %v799 = vpop.f32.mrf.mxu0
        %800 = vmatprep.mubr.f32.mxu0 0.0
        %801 = vmatmul.mubr.f32.gmra.mxu0 %v555
        %v802 = vpop.f32.mrf.mxu0
        %v803 = vadd.f32 %v644, %v802
        %v804 = vpop.f32.mrf.mxu0
        %805 = vmatprep.mubr.f32.mxu0 0.0
        %806 = vmatmul.mubr.f32.gmra.mxu0 %v560
        %v807 = vpop.f32.mrf.mxu0
        %v808 = vadd.f32 %v644, %v807
        %v809 = vpop.f32.mrf.mxu0
        %810 = vmatprep.mubr.f32.mxu0 0.0
        %811 = vmatmul.mubr.f32.gmra.mxu0 %v565
        %v812 = vpop.f32.mrf.mxu0
        %v813 = vadd.f32 %v644, %v812
        %v814 = vpop.f32.mrf.mxu0
        %815 = vmatprep.mubr.f32.mxu0 0.0
        %816 = vmatmul.mubr.f32.gmra.mxu0 %v570
        %v817 = vpop.f32.mrf.mxu0
        %v818 = vadd.f32 %v644, %v817
        %v819 = vpop.f32.mrf.mxu0
        %820 = vmatprep.mubr.f32.mxu0 0.0
        %821 = vmatmul.mubr.f32.gmra.mxu0 %v575
        %v822 = vpop.f32.mrf.mxu0
        %v823 = vadd.f32 %v644, %v822
        %v824 = vpop.f32.mrf.mxu0
        %825 = vmatprep.mubr.f32.mxu0 0.0
        %826 = vmatmul.mubr.f32.gmra.mxu0 %v580
        %v827 = vpop.f32.mrf.mxu0
        %v828 = vadd.f32 %v644, %v827
        %v829 = vpop.f32.mrf.mxu0
        %830 = vmatprep.mubr.f32.mxu0 0.0
        %831 = vmatmul.mubr.f32.gmra.mxu0 %v585
        %v832 = vpop.f32.mrf.mxu0
        %v833 = vadd.f32 %v644, %v832
        %v834 = vpop.f32.mrf.mxu0
        %835 = vmatprep.mubr.f32.mxu0 0.0
        %836 = vmatmul.mubr.f32.gmra.mxu0 %v590
        %v837 = vpop.f32.mrf.mxu0
        %v838 = vadd.f32 %v644, %v837
        %v839 = vpop.f32.mrf.mxu0
        %840 = vmatprep.mubr.f32.mxu0 0.0
        %841 = vmatmul.mubr.f32.gmra.mxu0 %v595
        %v842 = vpop.f32.mrf.mxu0
        %v843 = vadd.f32 %v644, %v842
        %v844 = vpop.f32.mrf.mxu0
        %845 = vmatprep.mubr.f32.mxu0 0.0
        %846 = vmatmul.mubr.f32.gmra.mxu0 %v600
        %v847 = vpop.f32.mrf.mxu0
        %v848 = vadd.f32 %v644, %v847
        %v849 = vpop.f32.mrf.mxu0
        %850 = vmatprep.mubr.f32.mxu0 0.0
        %851 = vmatmul.mubr.f32.gmra.mxu0 %v605
        %v852 = vpop.f32.mrf.mxu0
        %v853 = vadd.f32 %v644, %v852
        %v854 = vpop.f32.mrf.mxu0
        %855 = vmatprep.mubr.f32.mxu0 0.0
        %856 = vmatmul.mubr.f32.gmra.mxu0 %v610
        %v857 = vpop.f32.mrf.mxu0
        %v858 = vadd.f32 %v644, %v857
        %v859 = vpop.f32.mrf.mxu0
        %860 = vmatprep.mubr.f32.mxu0 0.0
        %861 = vmatmul.mubr.f32.gmra.mxu0 %v615
        %v862 = vpop.f32.mrf.mxu0
        %v863 = vadd.f32 %v644, %v862
        %v864 = vpop.f32.mrf.mxu0
        %865 = vmatprep.mubr.f32.mxu0 0.0
        %866 = vmatmul.mubr.f32.gmra.mxu0 %v620
        %v867 = vpop.f32.mrf.mxu0
        %v868 = vadd.f32 %v644, %v867
        %v869 = vpop.f32.mrf.mxu0
        %870 = vdwg.mxu0
        %v871 = vld [vmem:[#allocation8] sm:$0xff]
        %v872 = vld [vmem:[#allocation8 + $0x8] sm:$0xff]
        %v873 = vld [vmem:[#allocation8 + $0x10] sm:$0xff]
        %v874 = vld [vmem:[#allocation8 + $0x18] sm:$0xff]
        %v875 = vld [vmem:[#allocation8 + $0x20] sm:$0xff]
        %v876 = vld [vmem:[#allocation8 + $0x28] sm:$0xff]
        %v877 = vld [vmem:[#allocation8 + $0x30] sm:$0xff]
        %v878 = vld [vmem:[#allocation8 + $0x38] sm:$0xff]
        %v879 = vld [vmem:[#allocation8 + $0x40] sm:$0xff]
        %v880 = vld [vmem:[#allocation8 + $0x48] sm:$0xff]
        %v881 = vld [vmem:[#allocation8 + $0x50] sm:$0xff]
        %v882 = vld [vmem:[#allocation8 + $0x58] sm:$0xff]
        %v883 = vld [vmem:[#allocation8 + $0x60] sm:$0xff]
        %v884 = vld [vmem:[#allocation8 + $0x68] sm:$0xff]
        %v885 = vld [vmem:[#allocation8 + $0x70] sm:$0xff]
        %v886 = vld [vmem:[#allocation8 + $0x78] sm:$0xff]
        %v887 = vld [vmem:[%s6] sm:$0x1]
        %v889 = vlaneseq
        %v890 = vshrl.u32 %v889, 7
        %v891 = vsub.s32 0, %v890
        %v892 = vrot.slane %v887, %v891
        %894 = vmatprep.subr.mxu0 0.0
        %895 = vmatpush1.msra.mxu0 %v886
        %896 = vmatprep.subr.mxu0 0.0
        %897 = vmatpush1.msra.mxu0 %v885
        %898 = vmatprep.subr.mxu0 0.0
        %899 = vmatpush1.msra.mxu0 %v884
        %900 = vmatprep.subr.mxu0 0.0
        %901 = vmatpush1.msra.mxu0 %v883
        %902 = vmatprep.subr.mxu0 0.0
        %903 = vmatpush1.msra.mxu0 %v882
        %904 = vmatprep.subr.mxu0 0.0
        %905 = vmatpush1.msra.mxu0 %v881
        %906 = vmatprep.subr.mxu0 0.0
        %907 = vmatpush1.msra.mxu0 %v880
        %908 = vmatprep.subr.mxu0 0.0
        %909 = vmatpush1.msra.mxu0 %v879
        %910 = vmatprep.subr.mxu0 0.0
        %911 = vmatpush1.msra.mxu0 %v878
        %912 = vmatprep.subr.mxu0 0.0
        %913 = vmatpush1.msra.mxu0 %v877
        %914 = vmatprep.subr.mxu0 0.0
        %915 = vmatpush1.msra.mxu0 %v876
        %916 = vmatprep.subr.mxu0 0.0
        %917 = vmatpush1.msra.mxu0 %v875
        %918 = vmatprep.subr.mxu0 0.0
        %919 = vmatpush1.msra.mxu0 %v874
        %920 = vmatprep.subr.mxu0 0.0
        %921 = vmatpush1.msra.mxu0 %v873
        %922 = vmatprep.subr.mxu0 0.0
        %923 = vmatpush1.msra.mxu0 %v872
        %924 = vmatprep.subr.mxu0 0.0
        %925 = vmatpush1.msra.mxu0 %v871
        %926 = vmatprep.subr.mxu0 0.0
        %927 = vmatpush2.msra.mxu0 0.0
        %928 = vmatprep.subr.mxu0 0.0
        %929 = vmatpush2.msra.mxu0 0.0
        %930 = vmatprep.subr.mxu0 0.0
        %931 = vmatpush2.msra.mxu0 0.0
        %932 = vmatprep.subr.mxu0 0.0
        %933 = vmatpush2.msra.mxu0 0.0
        %934 = vmatprep.subr.mxu0 0.0
        %935 = vmatpush2.msra.mxu0 0.0
        %936 = vmatprep.subr.mxu0 0.0
        %937 = vmatpush2.msra.mxu0 0.0
        %938 = vmatprep.subr.mxu0 0.0
        %939 = vmatpush2.msra.mxu0 0.0
        %940 = vmatprep.subr.mxu0 0.0
        %941 = vmatpush2.msra.mxu0 0.0
        %942 = vmatprep.subr.mxu0 0.0
        %943 = vmatpush2.msra.mxu0 0.0
        %944 = vmatprep.subr.mxu0 0.0
        %945 = vmatpush2.msra.mxu0 0.0
        %946 = vmatprep.subr.mxu0 0.0
        %947 = vmatpush2.msra.mxu0 0.0
        %948 = vmatprep.subr.mxu0 0.0
        %949 = vmatpush2.msra.mxu0 0.0
        %950 = vmatprep.subr.mxu0 0.0
        %951 = vmatpush2.msra.mxu0 0.0
        %952 = vmatprep.subr.mxu0 0.0
        %953 = vmatpush2.msra.mxu0 0.0
        %954 = vmatprep.subr.mxu0 0.0
        %955 = vmatpush2.msra.mxu0 0.0
        %956 = vmatprep.subr.mxu0 0.0
        %957 = vmatpush2.msra.mxu0 0.0
        %958 = vmatprep.mubr.f32.mxu0 0.0
        %959 = vmatmul.mubr.f32.gmra.mxu0 %v713
        %v960 = vpop.f32.mrf.mxu0
        %v961 = vadd.f32 %v892, %v960
        %v962 = vpop.f32.mrf.mxu0
        %963 = vmatprep.mubr.f32.mxu0 0.0
        %964 = vmatmul.mubr.f32.gmra.mxu0 %v718
        %v965 = vpop.f32.mrf.mxu0
        %v966 = vadd.f32 %v892, %v965
        %v967 = vpop.f32.mrf.mxu0
        %968 = vmatprep.mubr.f32.mxu0 0.0
        %969 = vmatmul.mubr.f32.gmra.mxu0 %v723
        %v970 = vpop.f32.mrf.mxu0
        %v971 = vadd.f32 %v892, %v970
        %v972 = vpop.f32.mrf.mxu0
        %973 = vmatprep.mubr.f32.mxu0 0.0
        %974 = vmatmul.mubr.f32.gmra.mxu0 %v728
        %v975 = vpop.f32.mrf.mxu0
        %v976 = vadd.f32 %v892, %v975
        %v977 = vpop.f32.mrf.mxu0
        %978 = vmatprep.mubr.f32.mxu0 0.0
        %979 = vmatmul.mubr.f32.gmra.mxu0 %v733
        %v980 = vpop.f32.mrf.mxu0
        %v981 = vadd.f32 %v892, %v980
        %v982 = vpop.f32.mrf.mxu0
        %983 = vmatprep.mubr.f32.mxu0 0.0
        %984 = vmatmul.mubr.f32.gmra.mxu0 %v738
        %v985 = vpop.f32.mrf.mxu0
        %v986 = vadd.f32 %v892, %v985
        %v987 = vpop.f32.mrf.mxu0
        %988 = vmatprep.mubr.f32.mxu0 0.0
        %989 = vmatmul.mubr.f32.gmra.mxu0 %v743
        %v990 = vpop.f32.mrf.mxu0
        %v991 = vadd.f32 %v892, %v990
        %v992 = vpop.f32.mrf.mxu0
        %993 = vmatprep.mubr.f32.mxu0 0.0
        %994 = vmatmul.mubr.f32.gmra.mxu0 %v748
        %v995 = vpop.f32.mrf.mxu0
        %v996 = vadd.f32 %v892, %v995
        %v997 = vpop.f32.mrf.mxu0
        %998 = vmatprep.mubr.f32.mxu0 0.0
        %999 = vmatmul.mubr.f32.gmra.mxu0 %v753
        %v1000 = vpop.f32.mrf.mxu0
        %v1001 = vadd.f32 %v892, %v1000
        %v1002 = vpop.f32.mrf.mxu0
        %1003 = vmatprep.mubr.f32.mxu0 0.0
        %1004 = vmatmul.mubr.f32.gmra.mxu0 %v758
        %v1005 = vpop.f32.mrf.mxu0
        %v1006 = vadd.f32 %v892, %v1005
        %v1007 = vpop.f32.mrf.mxu0
        %1008 = vmatprep.mubr.f32.mxu0 0.0
        %1009 = vmatmul.mubr.f32.gmra.mxu0 %v763
        %v1010 = vpop.f32.mrf.mxu0
        %v1011 = vadd.f32 %v892, %v1010
        %v1012 = vpop.f32.mrf.mxu0
        %1013 = vmatprep.mubr.f32.mxu0 0.0
        %1014 = vmatmul.mubr.f32.gmra.mxu0 %v768
        %v1015 = vpop.f32.mrf.mxu0
        %v1016 = vadd.f32 %v892, %v1015
        %v1017 = vpop.f32.mrf.mxu0
        %1018 = vmatprep.mubr.f32.mxu0 0.0
        %1019 = vmatmul.mubr.f32.gmra.mxu0 %v773
        %v1020 = vpop.f32.mrf.mxu0
        %v1021 = vadd.f32 %v892, %v1020
        %v1022 = vpop.f32.mrf.mxu0
        %1023 = vmatprep.mubr.f32.mxu0 0.0
        %1024 = vmatmul.mubr.f32.gmra.mxu0 %v778
        %v1025 = vpop.f32.mrf.mxu0
        %v1026 = vadd.f32 %v892, %v1025
        %v1027 = vpop.f32.mrf.mxu0
        %1028 = vmatprep.mubr.f32.mxu0 0.0
        %1029 = vmatmul.mubr.f32.gmra.mxu0 %v783
        %v1030 = vpop.f32.mrf.mxu0
        %v1031 = vadd.f32 %v892, %v1030
        %v1032 = vpop.f32.mrf.mxu0
        %1033 = vmatprep.mubr.f32.mxu0 0.0
        %1034 = vmatmul.mubr.f32.gmra.mxu0 %v788
        %v1035 = vpop.f32.mrf.mxu0
        %v1036 = vadd.f32 %v892, %v1035
        %v1037 = vpop.f32.mrf.mxu0
        %1038 = vmatprep.mubr.f32.mxu0 0.0
        %1039 = vmatmul.mubr.f32.gmra.mxu0 %v793
        %v1040 = vpop.f32.mrf.mxu0
        %v1041 = vadd.f32 %v892, %v1040
        %v1042 = vpop.f32.mrf.mxu0
        %1043 = vmatprep.mubr.f32.mxu0 0.0
        %1044 = vmatmul.mubr.f32.gmra.mxu0 %v798
        %v1045 = vpop.f32.mrf.mxu0
        %v1046 = vadd.f32 %v892, %v1045
        %v1047 = vpop.f32.mrf.mxu0
        %1048 = vmatprep.mubr.f32.mxu0 0.0
        %1049 = vmatmul.mubr.f32.gmra.mxu0 %v803
        %v1050 = vpop.f32.mrf.mxu0
        %v1051 = vadd.f32 %v892, %v1050
        %v1052 = vpop.f32.mrf.mxu0
        %1053 = vmatprep.mubr.f32.mxu0 0.0
        %1054 = vmatmul.mubr.f32.gmra.mxu0 %v808
        %v1055 = vpop.f32.mrf.mxu0
        %v1056 = vadd.f32 %v892, %v1055
        %v1057 = vpop.f32.mrf.mxu0
        %1058 = vmatprep.mubr.f32.mxu0 0.0
        %1059 = vmatmul.mubr.f32.gmra.mxu0 %v813
        %v1060 = vpop.f32.mrf.mxu0
        %v1061 = vadd.f32 %v892, %v1060
        %v1062 = vpop.f32.mrf.mxu0
        %1063 = vmatprep.mubr.f32.mxu0 0.0
        %1064 = vmatmul.mubr.f32.gmra.mxu0 %v818
        %v1065 = vpop.f32.mrf.mxu0
        %v1066 = vadd.f32 %v892, %v1065
        %v1067 = vpop.f32.mrf.mxu0
        %1068 = vmatprep.mubr.f32.mxu0 0.0
        %1069 = vmatmul.mubr.f32.gmra.mxu0 %v823
        %v1070 = vpop.f32.mrf.mxu0
        %v1071 = vadd.f32 %v892, %v1070
        %v1072 = vpop.f32.mrf.mxu0
        %1073 = vmatprep.mubr.f32.mxu0 0.0
        %1074 = vmatmul.mubr.f32.gmra.mxu0 %v828
        %v1075 = vpop.f32.mrf.mxu0
        %v1076 = vadd.f32 %v892, %v1075
        %v1077 = vpop.f32.mrf.mxu0
        %1078 = vmatprep.mubr.f32.mxu0 0.0
        %1079 = vmatmul.mubr.f32.gmra.mxu0 %v833
        %v1080 = vpop.f32.mrf.mxu0
        %v1081 = vadd.f32 %v892, %v1080
        %v1082 = vpop.f32.mrf.mxu0
        %1083 = vmatprep.mubr.f32.mxu0 0.0
        %1084 = vmatmul.mubr.f32.gmra.mxu0 %v838
        %v1085 = vpop.f32.mrf.mxu0
        %v1086 = vadd.f32 %v892, %v1085
        %v1087 = vpop.f32.mrf.mxu0
        %1088 = vmatprep.mubr.f32.mxu0 0.0
        %1089 = vmatmul.mubr.f32.gmra.mxu0 %v843
        %v1090 = vpop.f32.mrf.mxu0
        %v1091 = vadd.f32 %v892, %v1090
        %v1092 = vpop.f32.mrf.mxu0
        %1093 = vmatprep.mubr.f32.mxu0 0.0
        %1094 = vmatmul.mubr.f32.gmra.mxu0 %v848
        %v1095 = vpop.f32.mrf.mxu0
        %v1096 = vadd.f32 %v892, %v1095
        %v1097 = vpop.f32.mrf.mxu0
        %1098 = vmatprep.mubr.f32.mxu0 0.0
        %1099 = vmatmul.mubr.f32.gmra.mxu0 %v853
        %v1100 = vpop.f32.mrf.mxu0
        %v1101 = vadd.f32 %v892, %v1100
        %v1102 = vpop.f32.mrf.mxu0
        %1103 = vmatprep.mubr.f32.mxu0 0.0
        %1104 = vmatmul.mubr.f32.gmra.mxu0 %v858
        %v1105 = vpop.f32.mrf.mxu0
        %v1106 = vadd.f32 %v892, %v1105
        %v1107 = vpop.f32.mrf.mxu0
        %1108 = vmatprep.mubr.f32.mxu0 0.0
        %1109 = vmatmul.mubr.f32.gmra.mxu0 %v863
        %v1110 = vpop.f32.mrf.mxu0
        %v1111 = vadd.f32 %v892, %v1110
        %v1112 = vpop.f32.mrf.mxu0
        %1113 = vmatprep.mubr.f32.mxu0 0.0
        %1114 = vmatmul.mubr.f32.gmra.mxu0 %v868
        %v1115 = vpop.f32.mrf.mxu0
        %v1116 = vadd.f32 %v892, %v1115
        %v1117 = vpop.f32.mrf.mxu0
        %1118 = vdwg.mxu0
        %1119 = vst [vmem:[%s340] sm:$0xff] %v961
        %1120 = vst [vmem:[%s340 + $0x8] sm:$0xff] %v966
        %1121 = vst [vmem:[%s340 + $0x10] sm:$0xff] %v971
        %1122 = vst [vmem:[%s340 + $0x18] sm:$0xff] %v976
        %1123 = vst [vmem:[%s340 + $0x20] sm:$0xff] %v981
        %1124 = vst [vmem:[%s340 + $0x28] sm:$0xff] %v986
        %1125 = vst [vmem:[%s340 + $0x30] sm:$0xff] %v991
        %1126 = vst [vmem:[%s340 + $0x38] sm:$0xff] %v996
        %1127 = vst [vmem:[%s340 + $0x40] sm:$0xff] %v1001
        %1128 = vst [vmem:[%s340 + $0x48] sm:$0xff] %v1006
        %1129 = vst [vmem:[%s340 + $0x50] sm:$0xff] %v1011
        %1130 = vst [vmem:[%s340 + $0x58] sm:$0xff] %v1016
        %1131 = vst [vmem:[%s340 + $0x60] sm:$0xff] %v1021
        %1132 = vst [vmem:[%s340 + $0x68] sm:$0xff] %v1026
        %1133 = vst [vmem:[%s340 + $0x70] sm:$0xff] %v1031
        %1134 = vst [vmem:[%s340 + $0x78] sm:$0xff] %v1036
        %1135 = vst [vmem:[%s340 + $0x80] sm:$0xff] %v1041
        %1136 = vst [vmem:[%s340 + $0x88] sm:$0xff] %v1046
        %1137 = vst [vmem:[%s340 + $0x90] sm:$0xff] %v1051
        %1138 = vst [vmem:[%s340 + $0x98] sm:$0xff] %v1056
        %1139 = vst [vmem:[%s340 + $0xa0] sm:$0xff] %v1061
        %1140 = vst [vmem:[%s340 + $0xa8] sm:$0xff] %v1066
        %1141 = vst [vmem:[%s340 + $0xb0] sm:$0xff] %v1071
        %1142 = vst [vmem:[%s340 + $0xb8] sm:$0xff] %v1076
        %1143 = vst [vmem:[%s340 + $0xc0] sm:$0xff] %v1081
        %1144 = vst [vmem:[%s340 + $0xc8] sm:$0xff] %v1086
        %1145 = vst [vmem:[%s340 + $0xd0] sm:$0xff] %v1091
        %1146 = vst [vmem:[%s340 + $0xd8] sm:$0xff] %v1096
        %1147 = vst [vmem:[%s340 + $0xe0] sm:$0xff] %v1101
        %1148 = vst [vmem:[%s340 + $0xe8] sm:$0xff] %v1106
        %1149 = vst [vmem:[%s340 + $0xf0] sm:$0xff] %v1111
        %1150 = vst [vmem:[%s340 + $0xf8] sm:$0xff] %v1116
        %s1151 = sand.u32 %s186, 1
        %s1152 = scalar_lea.sflag [#allocation4], %s1151
        %s1153 = sand.u32 %s186, 1
        %s1154 = smul.addr %s1153, 256
        %s1155 = scalar_lea.vmem [#allocation10], %s1154
        // Predicated region
        $region65: #{tpu_custom_call.1} parent=47 // pred_check
          %p1156 = pneg %p196
        $region66: #{tpu_custom_call.1} parent=47 // pred_check_branch
          %1158 = sbr.rel (%p1156) target = $region68
        $region67: #{tpu_custom_call.1} parent=47 // pred_region
          %s1159 = smul.u32 32, %s26
          %s1161 = ssub.s32 4096, 4096
          %1162 = vsyncadd %s1152, %s1161
          %s1163 = smul.addr %s1159, 128
          %s1164 = scalar_lea.hbm %s7, %s1163
          %s1165 = sshll.u32 %s1155, 4
          %s1166 = int_to_ptr.vmem [resolvable:$true] %s1165
          %1171 = dma.vmem_to_hbm [thread:$0]  %s1166, 4096, %s1164, %s1152, 128, 128, 8
        $region68: #{tpu_custom_call.1} parent=47 // pred_fallthru
          _
      $region48: #{tpu_custom_call.1} parent=5 // pred_fallthru
        _
      %p1172 = scmp.le.s32.totalorder 2, %s21
      // Predicated region
      $region69: #{tpu_custom_call.1} parent=5 // pred_check
        %p1173 = pneg %p1172
      $region70: #{tpu_custom_call.1} parent=5 // pred_check_branch
        %1175 = sbr.rel (%p1173) target = $region72
      $region71: #{tpu_custom_call.1} parent=5 // pred_region
        %s1176 = ssub.s32 %s21, 2
        // Predicated region
        $region73: #{tpu_custom_call.1} parent=71 // pred_check
          %p1177 = pneg %p202
        $region74: #{tpu_custom_call.1} parent=71 // pred_check_branch
          %1179 = sbr.rel (%p1177) target = $region76
        $region75: #{tpu_custom_call.1} parent=71 // pred_region
          %s1180 = sand.u32 %s187, 1
          %s1181 = scalar_lea.sflag [#allocation4], %s1180
          %s1182 = sand.u32 %s187, 1
          %s1183 = smul.addr %s1182, 256
          %s1184 = scalar_lea.vmem [#allocation10], %s1183
          %1185 = dma.done %s1181, 4096
        $region76: #{tpu_custom_call.1} parent=71 // pred_fallthru
          _
      $region72: #{tpu_custom_call.1} parent=5 // pred_fallthru
        _
    $region6: #{tpu_custom_call.1} parent=1 // loop_footer
      %s25 = sadd.s32 1, %s21
    $region7: #{tpu_custom_call.1} parent=1 // loop_footer_branch
      %20 = sbr.rel target = $region3
    $region8: #{tpu_custom_call.1} parent=1 // loop_exit
      _
    %1186 = vsyncpa [#allocation3], 1
    %s1187 = scalar_lea.sflag [#allocation3], 1
    %1188 = vsyncpa %s1187, 1
    %1189 = vsyncpa [#allocation6], 1
    %1190 = vsyncpa [#allocation9], 1
    %1191 = vsyncpa [#allocation4], 1
    %s1192 = scalar_lea.sflag [#allocation4], 1
    %1193 = vsyncpa %s1192, 1

// kernel: tpu_custom_call.1
$region0: #{tpu_custom_call.1}
  #allocation0 [shape = 'u32[]', space=smem, size = 0x4, offset = 0x4, fixed_abs, tag = 'smem constant byte address 0x4 - core index']
  #allocation1 [shape = 'u32[144,128]{1,0:T(1,128)}', space=vmem, size = 0x12000, scoped, tag = 'internal scratch']
  %s0 = inlined_call_operand.hbm [shape: f32[512,128], index: 0, kind: input, shape index: {}]
  %s1 = inlined_call_operand.hbm [shape: f32[128,128], index: 1, kind: input, shape index: {}]
  %s2 = inlined_call_operand.vmem [shape: f32[1,128], index: 2, kind: input, shape index: {}]
  %s3 = inlined_call_operand.hbm [shape: f32[128,128], index: 3, kind: input, shape index: {}]
  %s4 = inlined_call_operand.vmem [shape: f32[1,128], index: 4, kind: input, shape index: {}]
  %s5 = inlined_call_operand.hbm [shape: f32[128,128], index: 5, kind: input, shape index: {}]
  %s6 = inlined_call_operand.vmem [shape: f32[1,128], index: 6, kind: input, shape index: {}]
  %s7 = inlined_call_operand.hbm [shape: f32[512,128], index: 7, kind: output, shape index: {}]
  %s8 = sld [smem:[#allocation0]]
  $region77: #{tpu_custom_call.1} parent=0
    _
  %s10 = ssub.s32 1, %s8
  %s11 = scalar_select 0, %s10, %s8
  $region1: #{tpu_custom_call.1} parent=0
    #allocation2 [shape = 'u8[262144]{0}', space=vmem, size = 0x40000, scoped, tag = 'input window, operand 0']
    #allocation3 [shape = 's32[2]{0}', space=sflag, size = 0x8, scoped, tag = 'scoped memory for tpu_custom_call.1']
    #allocation4 [shape = 's32[2]{0}', space=sflag, size = 0x8, scoped, tag = 'scoped memory for tpu_custom_call.1']
    #allocation5 [shape = 'u8[65536]{0}', space=vmem, size = 0x10000, scoped, tag = 'input window, operand 1, single buffered']
    #allocation6 [shape = 's32[1]{0}', space=sflag, size = 0x4, scoped, tag = 'scoped memory for tpu_custom_call.1']
    #allocation7 [shape = 'u8[65536]{0}', space=vmem, size = 0x10000, scoped, tag = 'input window, operand 3, single buffered']
    #allocation8 [shape = 'u8[65536]{0}', space=vmem, size = 0x10000, scoped, tag = 'input window, operand 5, single buffered']
    #allocation9 [shape = 's32[1]{0}', space=sflag, size = 0x4, scoped, tag = 'scoped memory for tpu_custom_call.1']
    #allocation10 [shape = 'u8[262144]{0}', space=vmem, size = 0x40000, scoped, tag = 'output window, operand 0']
    %12 = vsyncpa [#allocation3], 0
    %s13 = scalar_lea.sflag [#allocation3], 1
    %14 = vsyncpa %s13, 0
    %15 = vsyncpa [#allocation6], 0
    %16 = vsyncpa [#allocation9], 0
    %17 = vsyncpa [#allocation4], 0
    %s18 = scalar_lea.sflag [#allocation4], 1
    %19 = vsyncpa %s18, 0
    loop: start=0, step=1, limit=4
    $region2: #{tpu_custom_call.1} parent=1 // loop_pre_header
      _
    $region3: #{tpu_custom_call.1} parent=1 // loop_header
      %s21 = sphi 0, %s25
      %p22 = scmp.ge.s32.totalorder %s21, 4
      %s31 = sphi 0, %s33
      %s34 = sphi 0, %s31
      %s35 = sphi 0, %s34
      %s51 = sphi 0, %s35
      %s55 = sphi 0, %s55
      %s57 = sphi 0, %s55
      %s58 = sphi 0, %s57
      %s72 = sphi 0, %s58
      %s76 = sphi 0, %s76
      %s78 = sphi 0, %s76
      %s79 = sphi 0, %s78
      %s93 = sphi 0, %s79
      %s97 = sphi 0, %s97
      %s99 = sphi 0, %s97
      %s100 = sphi 0, %s99
      %s114 = sphi 0, %s100
      %s118 = sphi 0, %s118
      %s120 = sphi 0, %s118
      %s121 = sphi 0, %s120
      %s135 = sphi 0, %s121
      %s139 = sphi 0, %s139
      %s141 = sphi 0, %s139
      %s142 = sphi 0, %s141
      %s156 = sphi 0, %s142
      %s160 = sphi 0, %s160
      %s162 = sphi 0, %s160
      %s163 = sphi 0, %s162
      %s177 = sphi 0, %s163
      %s183 = sphi 0, %s185
      %s186 = sphi 0, %s183
      %s187 = sphi 0, %s186
      %s203 = sphi 0, %s187
    $region4: #{tpu_custom_call.1} parent=1 // loop_header_branch
      %24 = sbr.rel (%p22) target = $region8
    $region5: #{tpu_custom_call.1} parent=1 // loop_body
      %s26 = ssub.s32 %s21, 1
      %s27 = ssub.s32 %s21, 2
      %s28 = sadd.s32 %s21, 1
      %s29 = ssub.s32 %s21, %s28
      %p30 = scmp.eq.s32.totalorder %s29, 0
      %s32 = sadd.s32 %s31, 1
      %s33 = scalar_select %p30, %s31, %s32
      %p36 = pneg %p30
      %p37 = scmp.eq.s32.totalorder %s21, 1
      %p38 = por %p36, %p37
      %p39 = scmp.ne.s32.totalorder %s31, %s34
      %p40 = scmp.eq.s32.totalorder %s21, 0
      %p41 = por %p39, %p40
      %p42 = scmp.ne.s32.totalorder %s31, %s34
      %p43 = scmp.eq.s32.totalorder %s26, 1
      %p44 = por %p42, %p43
      %p45 = scmp.ne.s32.totalorder %s34, %s35
      %p46 = scmp.eq.s32.totalorder %s26, 0
      %p47 = por %p45, %p46
      %p48 = scmp.ne.s32.totalorder %s34, %s35
      %p49 = scmp.eq.s32.totalorder %s27, 1
      %p50 = por %p48, %p49
      %p52 = scmp.ne.s32.totalorder %s35, %s51
      %p53 = scmp.eq.s32.totalorder %s27, 0
      %p54 = por %p52, %p53
      %s56 = sadd.s32 %s55, 1
      %p59 = scmp.eq.s32.totalorder %s21, 1
      %p60 = scmp.ne.s32.totalorder %s55, %s57
      %p61 = scmp.eq.s32.totalorder %s21, 0
      %p62 = por %p60, %p61
      %p63 = scmp.ne.s32.totalorder %s55, %s57
      %p64 = scmp.eq.s32.totalorder %s26, 1
      %p65 = por %p63, %p64
      %p66 = scmp.ne.s32.totalorder %s57, %s58
      %p67 = scmp.eq.s32.totalorder %s26, 0
      %p68 = por %p66, %p67
      %p69 = scmp.ne.s32.totalorder %s57, %s58
      %p70 = scmp.eq.s32.totalorder %s27, 1
      %p71 = por %p69, %p70
      %p73 = scmp.ne.s32.totalorder %s58, %s72
      %p74 = scmp.eq.s32.totalorder %s27, 0
      %p75 = por %p73, %p74
      %s77 = sadd.s32 %s76, 1
      %p80 = scmp.eq.s32.totalorder %s21, 1
      %p81 = scmp.ne.s32.totalorder %s76, %s78
      %p82 = scmp.eq.s32.totalorder %s21, 0
      %p83 = por %p81, %p82
      %p84 = scmp.ne.s32.totalorder %s76, %s78
      %p85 = scmp.eq.s32.totalorder %s26, 1
      %p86 = por %p84, %p85
      %p87 = scmp.ne.s32.totalorder %s78, %s79
      %p88 = scmp.eq.s32.totalorder %s26, 0
      %p89 = por %p87, %p88
      %p90 = scmp.ne.s32.totalorder %s78, %s79
      %p91 = scmp.eq.s32.totalorder %s27, 1
      %p92 = por %p90, %p91
      %p94 = scmp.ne.s32.totalorder %s79, %s93
      %p95 = scmp.eq.s32.totalorder %s27, 0
      %p96 = por %p94, %p95
      %s98 = sadd.s32 %s97, 1
      %p101 = scmp.eq.s32.totalorder %s21, 1
      %p102 = scmp.ne.s32.totalorder %s97, %s99
      %p103 = scmp.eq.s32.totalorder %s21, 0
      %p104 = por %p102, %p103
      %p105 = scmp.ne.s32.totalorder %s97, %s99
      %p106 = scmp.eq.s32.totalorder %s26, 1
      %p107 = por %p105, %p106
      %p108 = scmp.ne.s32.totalorder %s99, %s100
      %p109 = scmp.eq.s32.totalorder %s26, 0
      %p110 = por %p108, %p109
      %p111 = scmp.ne.s32.totalorder %s99, %s100
      %p112 = scmp.eq.s32.totalorder %s27, 1
      %p113 = por %p111, %p112
      %p115 = scmp.ne.s32.totalorder %s100, %s114
      %p116 = scmp.eq.s32.totalorder %s27, 0
      %p117 = por %p115, %p116
      %s119 = sadd.s32 %s118, 1
      %p122 = scmp.eq.s32.totalorder %s21, 1
      %p123 = scmp.ne.s32.totalorder %s118, %s120
      %p124 = scmp.eq.s32.totalorder %s21, 0
      %p125 = por %p123, %p124
      %p126 = scmp.ne.s32.totalorder %s118, %s120
      %p127 = scmp.eq.s32.totalorder %s26, 1
      %p128 = por %p126, %p127
      %p129 = scmp.ne.s32.totalorder %s120, %s121
      %p130 = scmp.eq.s32.totalorder %s26, 0
      %p131 = por %p129, %p130
      %p132 = scmp.ne.s32.totalorder %s120, %s121
      %p133 = scmp.eq.s32.totalorder %s27, 1
      %p134 = por %p132, %p133
      %p136 = scmp.ne.s32.totalorder %s121, %s135
      %p137 = scmp.eq.s32.totalorder %s27, 0
      %p138 = por %p136, %p137
      %s140 = sadd.s32 %s139, 1
      %p143 = scmp.eq.s32.totalorder %s21, 1
      %p144 = scmp.ne.s32.totalorder %s139, %s141
      %p145 = scmp.eq.s32.totalorder %s21, 0
      %p146 = por %p144, %p145
      %p147 = scmp.ne.s32.totalorder %s139, %s141
      %p148 = scmp.eq.s32.totalorder %s26, 1
      %p149 = por %p147, %p148
      %p150 = scmp.ne.s32.totalorder %s141, %s142
      %p151 = scmp.eq.s32.totalorder %s26, 0
      %p152 = por %p150, %p151
      %p153 = scmp.ne.s32.totalorder %s141, %s142
      %p154 = scmp.eq.s32.totalorder %s27, 1
      %p155 = por %p153, %p154
      %p157 = scmp.ne.s32.totalorder %s142, %s156
      %p158 = scmp.eq.s32.totalorder %s27, 0
      %p159 = por %p157, %p158
      %s161 = sadd.s32 %s160, 1
      %p164 = scmp.eq.s32.totalorder %s21, 1
      %p165 = scmp.ne.s32.totalorder %s160, %s162
      %p166 = scmp.eq.s32.totalorder %s21, 0
      %p167 = por %p165, %p166
      %p168 = scmp.ne.s32.totalorder %s160, %s162
      %p169 = scmp.eq.s32.totalorder %s26, 1
      %p170 = por %p168, %p169
      %p171 = scmp.ne.s32.totalorder %s162, %s163
      %p172 = scmp.eq.s32.totalorder %s26, 0
      %p173 = por %p171, %p172
      %p174 = scmp.ne.s32.totalorder %s162, %s163
      %p175 = scmp.eq.s32.totalorder %s27, 1
      %p176 = por %p174, %p175
      %p178 = scmp.ne.s32.totalorder %s163, %s177
      %p179 = scmp.eq.s32.totalorder %s27, 0
      %p180 = por %p178, %p179
      %s181 = ssub.s32 %s21, %s28
      %p182 = scmp.eq.s32.totalorder %s181, 0
      %s184 = sadd.s32 %s183, 1
      %s185 = scalar_select %p182, %s183, %s184
      %p188 = pneg %p182
      %p189 = scmp.eq.s32.totalorder %s21, 1
      %p190 = por %p188, %p189
      %p191 = scmp.ne.s32.totalorder %s183, %s186
      %p192 = scmp.eq.s32.totalorder %s21, 0
      %p193 = por %p191, %p192
      %p194 = scmp.ne.s32.totalorder %s183, %s186
      %p195 = scmp.eq.s32.totalorder %s26, 1
      %p196 = por %p194, %p195
      %p197 = scmp.ne.s32.totalorder %s186, %s187
      %p198 = scmp.eq.s32.totalorder %s26, 0
      %p199 = por %p197, %p198
      %p200 = scmp.ne.s32.totalorder %s186, %s187
      %p201 = scmp.eq.s32.totalorder %s27, 1
      %p202 = por %p200, %p201
      %p204 = scmp.ne.s32.totalorder %s187, %s203
      %p205 = scmp.eq.s32.totalorder %s27, 0
      %p206 = por %p204, %p205
      %p207 = scmp.le.s32.totalorder 1, %s21
      %p208 = scmp.lt.s32.totalorder %s21, 3
      %p209 = pnand %p207, %p208
      %p210 = pneg %p209
      // Predicated region
      $region9: #{tpu_custom_call.1} parent=5 // pred_check
        _
      $region10: #{tpu_custom_call.1} parent=5 // pred_check_branch
        %212 = sbr.rel (%p209) target = $region12
      $region11: #{tpu_custom_call.1} parent=5 // pred_region
        %s213 = ssub.s32 %s21, 1
        // Predicated region
        $region13: #{tpu_custom_call.1} parent=11 // pred_check
          %p214 = pneg %p68
        $region14: #{tpu_custom_call.1} parent=11 // pred_check_branch
          %216 = sbr.rel (%p214) target = $region16
        $region15: #{tpu_custom_call.1} parent=11 // pred_region
          %s218 = ssub.s32 2048, 2048
          %219 = vsyncadd [#allocation6], %s218
          %s220 = sshll.u32 [#allocation5], 4
          %s221 = int_to_ptr.vmem [resolvable:$true] %s220
          %226 = dma.hbm_to_vmem [thread:$0]  %s1, 2048, %s221, [#allocation6], 128, 128, 8
        $region16: #{tpu_custom_call.1} parent=11 // pred_fallthru
          _
        // Predicated region
        $region17: #{tpu_custom_call.1} parent=11 // pred_check
          %p227 = pneg %p89
        $region18: #{tpu_custom_call.1} parent=11 // pred_check_branch
          %229 = sbr.rel (%p227) target = $region20
        $region19: #{tpu_custom_call.1} parent=11 // pred_region
          _
        $region20: #{tpu_custom_call.1} parent=11 // pred_fallthru
          _
        // Predicated region
        $region21: #{tpu_custom_call.1} parent=11 // pred_check
          %p230 = pneg %p110
        $region22: #{tpu_custom_call.1} parent=11 // pred_check_branch
          %232 = sbr.rel (%p230) target = $region24
        $region23: #{tpu_custom_call.1} parent=11 // pred_region
          %s234 = ssub.s32 2048, 2048
          %235 = vsyncadd [#allocation6], %s234
          %s236 = sshll.u32 [#allocation7], 4
          %s237 = int_to_ptr.vmem [resolvable:$true] %s236
          %242 = dma.hbm_to_vmem [thread:$0]  %s3, 2048, %s237, [#allocation6], 128, 128, 8
        $region24: #{tpu_custom_call.1} parent=11 // pred_fallthru
          _
        // Predicated region
        $region25: #{tpu_custom_call.1} parent=11 // pred_check
          %p243 = pneg %p131
        $region26: #{tpu_custom_call.1} parent=11 // pred_check_branch
          %245 = sbr.rel (%p243) target = $region28
        $region27: #{tpu_custom_call.1} parent=11 // pred_region
          _
        $region28: #{tpu_custom_call.1} parent=11 // pred_fallthru
          _
        // Predicated region
        $region29: #{tpu_custom_call.1} parent=11 // pred_check
          %p246 = pneg %p152
        $region30: #{tpu_custom_call.1} parent=11 // pred_check_branch
          %248 = sbr.rel (%p246) target = $region32
        $region31: #{tpu_custom_call.1} parent=11 // pred_region
          %s250 = ssub.s32 2048, 2048
          %251 = vsyncadd [#allocation9], %s250
          %s252 = sshll.u32 [#allocation8], 4
          %s253 = int_to_ptr.vmem [resolvable:$true] %s252
          %258 = dma.hbm_to_vmem [thread:$0]  %s5, 2048, %s253, [#allocation9], 128, 128, 8
        $region32: #{tpu_custom_call.1} parent=11 // pred_fallthru
          _
        // Predicated region
        $region33: #{tpu_custom_call.1} parent=11 // pred_check
          %p259 = pneg %p173
        $region34: #{tpu_custom_call.1} parent=11 // pred_check_branch
          %261 = sbr.rel (%p259) target = $region36
        $region35: #{tpu_custom_call.1} parent=11 // pred_region
          _
        $region36: #{tpu_custom_call.1} parent=11 // pred_fallthru
          _
      $region12: #{tpu_custom_call.1} parent=5 // pred_fallthru
        _
      %p262 = scmp.lt.s32.totalorder %s21, 2
      // Predicated region
      $region37: #{tpu_custom_call.1} parent=5 // pred_check
        %p263 = pneg %p262
      $region38: #{tpu_custom_call.1} parent=5 // pred_check_branch
        %265 = sbr.rel (%p263) target = $region40
      $region39: #{tpu_custom_call.1} parent=5 // pred_region
        // Predicated region
        $region41: #{tpu_custom_call.1} parent=39 // pred_check
          %p266 = pneg %p41
        $region42: #{tpu_custom_call.1} parent=39 // pred_check_branch
          %268 = sbr.rel (%p266) target = $region44
        $region43: #{tpu_custom_call.1} parent=39 // pred_region
          %s269 = sand.u32 %s31, 1
          %s270 = scalar_lea.sflag [#allocation3], %s269
          %s271 = sand.u32 %s31, 1
          %s272 = smul.addr %s271, 256
          %s273 = scalar_lea.vmem [#allocation2], %s272
          %s274 = smul.u32 32, %s21
          %s276 = ssub.s32 4096, 4096
          %277 = vsyncadd %s270, %s276
          %s278 = smul.addr %s274, 128
          %s279 = scalar_lea.hbm %s0, %s278
          %s280 = sshll.u32 %s273, 4
          %s281 = int_to_ptr.vmem [resolvable:$true] %s280
          %286 = dma.hbm_to_vmem [thread:$0]  %s279, 4096, %s281, %s270, 128, 128, 8
        $region44: #{tpu_custom_call.1} parent=39 // pred_fallthru
          _
      $region40: #{tpu_custom_call.1} parent=5 // pred_fallthru
        _
      %p287 = scmp.le.s32.totalorder 1, %s21
      %p288 = scmp.lt.s32.totalorder %s21, 3
      %p289 = pnand %p287, %p288
      %p290 = pneg %p289
      // Predicated region
      $region45: #{tpu_custom_call.1} parent=5 // pred_check
        _
      $region46: #{tpu_custom_call.1} parent=5 // pred_check_branch
        %292 = sbr.rel (%p289) target = $region48
      $region47: #{tpu_custom_call.1} parent=5 // pred_region
        %s293 = ssub.s32 %s21, 1
        %s294 = sand.u32 %s34, 1
        %s295 = scalar_lea.sflag [#allocation3], %s294
        %s296 = sand.u32 %s34, 1
        %s297 = smul.addr %s296, 256
        %s298 = scalar_lea.vmem [#allocation2], %s297
        // Predicated region
        $region49: #{tpu_custom_call.1} parent=47 // pred_check
          %p299 = pneg %p47
        $region50: #{tpu_custom_call.1} parent=47 // pred_check_branch
          %301 = sbr.rel (%p299) target = $region52
        $region51: #{tpu_custom_call.1} parent=47 // pred_region
          %302 = dma.done %s295, 4096
        $region52: #{tpu_custom_call.1} parent=47 // pred_fallthru
          _
        // Predicated region
        $region53: #{tpu_custom_call.1} parent=47 // pred_check
          %p303 = pneg %p68
        $region54: #{tpu_custom_call.1} parent=47 // pred_check_branch
          %305 = sbr.rel (%p303) target = $region56
        $region55: #{tpu_custom_call.1} parent=47 // pred_region
          %306 = dma.done [#allocation6], 2048
        $region56: #{tpu_custom_call.1} parent=47 // pred_fallthru
          _
        // Predicated region
        $region57: #{tpu_custom_call.1} parent=47 // pred_check
          %p307 = pneg %p110
        $region58: #{tpu_custom_call.1} parent=47 // pred_check_branch
          %309 = sbr.rel (%p307) target = $region60
        $region59: #{tpu_custom_call.1} parent=47 // pred_region
          %310 = dma.done [#allocation6], 2048
        $region60: #{tpu_custom_call.1} parent=47 // pred_fallthru
          _
        // Predicated region
        $region61: #{tpu_custom_call.1} parent=47 // pred_check
          %p311 = pneg %p152
        $region62: #{tpu_custom_call.1} parent=47 // pred_check_branch
          %313 = sbr.rel (%p311) target = $region64
        $region63: #{tpu_custom_call.1} parent=47 // pred_region
          %314 = dma.done [#allocation9], 2048
        $region64: #{tpu_custom_call.1} parent=47 // pred_fallthru
          _
        %s315 = sand.u32 %s34, 1
        %s316 = scalar_lea.sflag [#allocation3], %s315
        %s317 = sand.u32 %s34, 1
        %s318 = smul.addr %s317, 256
        %s319 = scalar_lea.vmem [#allocation2], %s318
        %p320 = pneg %p47
        %p321 = pneg %p44
        %p322 = pneg %p68
        %p323 = pneg %p65
        %p324 = pneg %p89
        %p325 = pneg %p86
        %p326 = pneg %p110
        %p327 = pneg %p107
        %p328 = pneg %p131
        %p329 = pneg %p128
        %p330 = pneg %p152
        %p331 = pneg %p149
        %p332 = pneg %p173
        %p333 = pneg %p170
        %p334 = pneg %p199
        %p335 = pneg %p196
        %s336 = sand.u32 %s186, 1
        %s337 = scalar_lea.sflag [#allocation4], %s336
        %s338 = sand.u32 %s186, 1
        %s339 = smul.addr %s338, 256
        %s340 = scalar_lea.vmem [#allocation10], %s339
        %s341 = smul.u32 32, %s26
        %s342 = smul.u32 32, %s26
        %v343 = vld [vmem:[%s298] sm:$0xff]
        %v344 = vld [vmem:[%s298 + $0x8] sm:$0xff]
        %v345 = vld [vmem:[%s298 + $0x10] sm:$0xff]
        %v346 = vld [vmem:[%s298 + $0x18] sm:$0xff]
        %v347 = vld [vmem:[%s298 + $0x20] sm:$0xff]
        %v348 = vld [vmem:[%s298 + $0x28] sm:$0xff]
        %v349 = vld [vmem:[%s298 + $0x30] sm:$0xff]
        %v350 = vld [vmem:[%s298 + $0x38] sm:$0xff]
        %v351 = vld [vmem:[%s298 + $0x40] sm:$0xff]
        %v352 = vld [vmem:[%s298 + $0x48] sm:$0xff]
        %v353 = vld [vmem:[%s298 + $0x50] sm:$0xff]
        %v354 = vld [vmem:[%s298 + $0x58] sm:$0xff]
        %v355 = vld [vmem:[%s298 + $0x60] sm:$0xff]
        %v356 = vld [vmem:[%s298 + $0x68] sm:$0xff]
        %v357 = vld [vmem:[%s298 + $0x70] sm:$0xff]
        %v358 = vld [vmem:[%s298 + $0x78] sm:$0xff]
        %v359 = vld [vmem:[%s298 + $0x80] sm:$0xff]
        %v360 = vld [vmem:[%s298 + $0x88] sm:$0xff]
        %v361 = vld [vmem:[%s298 + $0x90] sm:$0xff]
        %v362 = vld [vmem:[%s298 + $0x98] sm:$0xff]
        %v363 = vld [vmem:[%s298 + $0xa0] sm:$0xff]
        %v364 = vld [vmem:[%s298 + $0xa8] sm:$0xff]
        %v365 = vld [vmem:[%s298 + $0xb0] sm:$0xff]
        %v366 = vld [vmem:[%s298 + $0xb8] sm:$0xff]
        %v367 = vld [vmem:[%s298 + $0xc0] sm:$0xff]
        %v368 = vld [vmem:[%s298 + $0xc8] sm:$0xff]
        %v369 = vld [vmem:[%s298 + $0xd0] sm:$0xff]
        %v370 = vld [vmem:[%s298 + $0xd8] sm:$0xff]
        %v371 = vld [vmem:[%s298 + $0xe0] sm:$0xff]
        %v372 = vld [vmem:[%s298 + $0xe8] sm:$0xff]
        %v373 = vld [vmem:[%s298 + $0xf0] sm:$0xff]
        %v374 = vld [vmem:[%s298 + $0xf8] sm:$0xff]
        %v375 = vld [vmem:[#allocation5] sm:$0xff]
        %v376 = vld [vmem:[#allocation5 + $0x8] sm:$0xff]
        %v377 = vld [vmem:[#allocation5 + $0x10] sm:$0xff]
        %v378 = vld [vmem:[#allocation5 + $0x18] sm:$0xff]
        %v379 = vld [vmem:[#allocation5 + $0x20] sm:$0xff]
        %v380 = vld [vmem:[#allocation5 + $0x28] sm:$0xff]
        %v381 = vld [vmem:[#allocation5 + $0x30] sm:$0xff]
        %v382 = vld [vmem:[#allocation5 + $0x38] sm:$0xff]
        %v383 = vld [vmem:[#allocation5 + $0x40] sm:$0xff]
        %v384 = vld [vmem:[#allocation5 + $0x48] sm:$0xff]
        %v385 = vld [vmem:[#allocation5 + $0x50] sm:$0xff]
        %v386 = vld [vmem:[#allocation5 + $0x58] sm:$0xff]
        %v387 = vld [vmem:[#allocation5 + $0x60] sm:$0xff]
        %v388 = vld [vmem:[#allocation5 + $0x68] sm:$0xff]
        %v389 = vld [vmem:[#allocation5 + $0x70] sm:$0xff]
        %v390 = vld [vmem:[#allocation5 + $0x78] sm:$0xff]
        %v391 = vld [vmem:[%s2] sm:$0x1]
        %v393 = vlaneseq
        %v394 = vshrl.u32 %v393, 7
        %v395 = vsub.s32 0, %v394
        %v396 = vrot.slane %v391, %v395
        %398 = vmatprep.subr.mxu0 0.0
        %399 = vmatpush1.msra.mxu0 %v390
        %400 = vmatprep.subr.mxu0 0.0
        %401 = vmatpush1.msra.mxu0 %v389
        %402 = vmatprep.subr.mxu0 0.0
        %403 = vmatpush1.msra.mxu0 %v388
        %404 = vmatprep.subr.mxu0 0.0
        %405 = vmatpush1.msra.mxu0 %v387
        %406 = vmatprep.subr.mxu0 0.0
        %407 = vmatpush1.msra.mxu0 %v386
        %408 = vmatprep.subr.mxu0 0.0
        %409 = vmatpush1.msra.mxu0 %v385
        %410 = vmatprep.subr.mxu0 0.0
        %411 = vmatpush1.msra.mxu0 %v384
        %412 = vmatprep.subr.mxu0 0.0
        %413 = vmatpush1.msra.mxu0 %v383
        %414 = vmatprep.subr.mxu0 0.0
        %415 = vmatpush1.msra.mxu0 %v382
        %416 = vmatprep.subr.mxu0 0.0
        %417 = vmatpush1.msra.mxu0 %v381
        %418 = vmatprep.subr.mxu0 0.0
        %419 = vmatpush1.msra.mxu0 %v380
        %420 = vmatprep.subr.mxu0 0.0
        %421 = vmatpush1.msra.mxu0 %v379
        %422 = vmatprep.subr.mxu0 0.0
        %423 = vmatpush1.msra.mxu0 %v378
        %424 = vmatprep.subr.mxu0 0.0
        %425 = vmatpush1.msra.mxu0 %v377
        %426 = vmatprep.subr.mxu0 0.0
        %427 = vmatpush1.msra.mxu0 %v376
        %428 = vmatprep.subr.mxu0 0.0
        %429 = vmatpush1.msra.mxu0 %v375
        %430 = vmatprep.subr.mxu0 0.0
        %431 = vmatpush2.msra.mxu0 0.0
        %432 = vmatprep.subr.mxu0 0.0
        %433 = vmatpush2.msra.mxu0 0.0
        %434 = vmatprep.subr.mxu0 0.0
        %435 = vmatpush2.msra.mxu0 0.0
        %436 = vmatprep.subr.mxu0 0.0
        %437 = vmatpush2.msra.mxu0 0.0
        %438 = vmatprep.subr.mxu0 0.0
        %439 = vmatpush2.msra.mxu0 0.0
        %440 = vmatprep.subr.mxu0 0.0
        %441 = vmatpush2.msra.mxu0 0.0
        %442 = vmatprep.subr.mxu0 0.0
        %443 = vmatpush2.msra.mxu0 0.0
        %444 = vmatprep.subr.mxu0 0.0
        %445 = vmatpush2.msra.mxu0 0.0
        %446 = vmatprep.subr.mxu0 0.0
        %447 = vmatpush2.msra.mxu0 0.0
        %448 = vmatprep.subr.mxu0 0.0
        %449 = vmatpush2.msra.mxu0 0.0
        %450 = vmatprep.subr.mxu0 0.0
        %451 = vmatpush2.msra.mxu0 0.0
        %452 = vmatprep.subr.mxu0 0.0
        %453 = vmatpush2.msra.mxu0 0.0
        %454 = vmatprep.subr.mxu0 0.0
        %455 = vmatpush2.msra.mxu0 0.0
        %456 = vmatprep.subr.mxu0 0.0
        %457 = vmatpush2.msra.mxu0 0.0
        %458 = vmatprep.subr.mxu0 0.0
        %459 = vmatpush2.msra.mxu0 0.0
        %460 = vmatprep.subr.mxu0 0.0
        %461 = vmatpush2.msra.mxu0 0.0
        %462 = vmatprep.mubr.f32.mxu0 0.0
        %463 = vmatmul.mubr.f32.gmra.mxu0 %v343
        %v464 = vpop.f32.mrf.mxu0
        %v465 = vadd.f32 %v396, %v464
        %v466 = vpop.f32.mrf.mxu0
        %467 = vmatprep.mubr.f32.mxu0 0.0
        %468 = vmatmul.mubr.f32.gmra.mxu0 %v344
        %v469 = vpop.f32.mrf.mxu0
        %v470 = vadd.f32 %v396, %v469
        %v471 = vpop.f32.mrf.mxu0
        %472 = vmatprep.mubr.f32.mxu0 0.0
        %473 = vmatmul.mubr.f32.gmra.mxu0 %v345
        %v474 = vpop.f32.mrf.mxu0
        %v475 = vadd.f32 %v396, %v474
        %v476 = vpop.f32.mrf.mxu0
        %477 = vmatprep.mubr.f32.mxu0 0.0
        %478 = vmatmul.mubr.f32.gmra.mxu0 %v346
        %v479 = vpop.f32.mrf.mxu0
        %v480 = vadd.f32 %v396, %v479
        %v481 = vpop.f32.mrf.mxu0
        %482 = vmatprep.mubr.f32.mxu0 0.0
        %483 = vmatmul.mubr.f32.gmra.mxu0 %v347
        %v484 = vpop.f32.mrf.mxu0
        %v485 = vadd.f32 %v396, %v484
        %v486 = vpop.f32.mrf.mxu0
        %487 = vmatprep.mubr.f32.mxu0 0.0
        %488 = vmatmul.mubr.f32.gmra.mxu0 %v348
        %v489 = vpop.f32.mrf.mxu0
        %v490 = vadd.f32 %v396, %v489
        %v491 = vpop.f32.mrf.mxu0
        %492 = vmatprep.mubr.f32.mxu0 0.0
        %493 = vmatmul.mubr.f32.gmra.mxu0 %v349
        %v494 = vpop.f32.mrf.mxu0
        %v495 = vadd.f32 %v396, %v494
        %v496 = vpop.f32.mrf.mxu0
        %497 = vmatprep.mubr.f32.mxu0 0.0
        %498 = vmatmul.mubr.f32.gmra.mxu0 %v350
        %v499 = vpop.f32.mrf.mxu0
        %v500 = vadd.f32 %v396, %v499
        %v501 = vpop.f32.mrf.mxu0
        %502 = vmatprep.mubr.f32.mxu0 0.0
        %503 = vmatmul.mubr.f32.gmra.mxu0 %v351
        %v504 = vpop.f32.mrf.mxu0
        %v505 = vadd.f32 %v396, %v504
        %v506 = vpop.f32.mrf.mxu0
        %507 = vmatprep.mubr.f32.mxu0 0.0
        %508 = vmatmul.mubr.f32.gmra.mxu0 %v352
        %v509 = vpop.f32.mrf.mxu0
        %v510 = vadd.f32 %v396, %v509
        %v511 = vpop.f32.mrf.mxu0
        %512 = vmatprep.mubr.f32.mxu0 0.0
        %513 = vmatmul.mubr.f32.gmra.mxu0 %v353
        %v514 = vpop.f32.mrf.mxu0
        %v515 = vadd.f32 %v396, %v514
        %v516 = vpop.f32.mrf.mxu0
        %517 = vmatprep.mubr.f32.mxu0 0.0
        %518 = vmatmul.mubr.f32.gmra.mxu0 %v354
        %v519 = vpop.f32.mrf.mxu0
        %v520 = vadd.f32 %v396, %v519
        %v521 = vpop.f32.mrf.mxu0
        %522 = vmatprep.mubr.f32.mxu0 0.0
        %523 = vmatmul.mubr.f32.gmra.mxu0 %v355
        %v524 = vpop.f32.mrf.mxu0
        %v525 = vadd.f32 %v396, %v524
        %v526 = vpop.f32.mrf.mxu0
        %527 = vmatprep.mubr.f32.mxu0 0.0
        %528 = vmatmul.mubr.f32.gmra.mxu0 %v356
        %v529 = vpop.f32.mrf.mxu0
        %v530 = vadd.f32 %v396, %v529
        %v531 = vpop.f32.mrf.mxu0
        %532 = vmatprep.mubr.f32.mxu0 0.0
        %533 = vmatmul.mubr.f32.gmra.mxu0 %v357
        %v534 = vpop.f32.mrf.mxu0
        %v535 = vadd.f32 %v396, %v534
        %v536 = vpop.f32.mrf.mxu0
        %537 = vmatprep.mubr.f32.mxu0 0.0
        %538 = vmatmul.mubr.f32.gmra.mxu0 %v358
        %v539 = vpop.f32.mrf.mxu0
        %v540 = vadd.f32 %v396, %v539
        %v541 = vpop.f32.mrf.mxu0
        %542 = vmatprep.mubr.f32.mxu0 0.0
        %543 = vmatmul.mubr.f32.gmra.mxu0 %v359
        %v544 = vpop.f32.mrf.mxu0
        %v545 = vadd.f32 %v396, %v544
        %v546 = vpop.f32.mrf.mxu0
        %547 = vmatprep.mubr.f32.mxu0 0.0
        %548 = vmatmul.mubr.f32.gmra.mxu0 %v360
        %v549 = vpop.f32.mrf.mxu0
        %v550 = vadd.f32 %v396, %v549
        %v551 = vpop.f32.mrf.mxu0
        %552 = vmatprep.mubr.f32.mxu0 0.0
        %553 = vmatmul.mubr.f32.gmra.mxu0 %v361
        %v554 = vpop.f32.mrf.mxu0
        %v555 = vadd.f32 %v396, %v554
        %v556 = vpop.f32.mrf.mxu0
        %557 = vmatprep.mubr.f32.mxu0 0.0
        %558 = vmatmul.mubr.f32.gmra.mxu0 %v362
        %v559 = vpop.f32.mrf.mxu0
        %v560 = vadd.f32 %v396, %v559
        %v561 = vpop.f32.mrf.mxu0
        %562 = vmatprep.mubr.f32.mxu0 0.0
        %563 = vmatmul.mubr.f32.gmra.mxu0 %v363
        %v564 = vpop.f32.mrf.mxu0
        %v565 = vadd.f32 %v396, %v564
        %v566 = vpop.f32.mrf.mxu0
        %567 = vmatprep.mubr.f32.mxu0 0.0
        %568 = vmatmul.mubr.f32.gmra.mxu0 %v364
        %v569 = vpop.f32.mrf.mxu0
        %v570 = vadd.f32 %v396, %v569
        %v571 = vpop.f32.mrf.mxu0
        %572 = vmatprep.mubr.f32.mxu0 0.0
        %573 = vmatmul.mubr.f32.gmra.mxu0 %v365
        %v574 = vpop.f32.mrf.mxu0
        %v575 = vadd.f32 %v396, %v574
        %v576 = vpop.f32.mrf.mxu0
        %577 = vmatprep.mubr.f32.mxu0 0.0
        %578 = vmatmul.mubr.f32.gmra.mxu0 %v366
        %v579 = vpop.f32.mrf.mxu0
        %v580 = vadd.f32 %v396, %v579
        %v581 = vpop.f32.mrf.mxu0
        %582 = vmatprep.mubr.f32.mxu0 0.0
        %583 = vmatmul.mubr.f32.gmra.mxu0 %v367
        %v584 = vpop.f32.mrf.mxu0
        %v585 = vadd.f32 %v396, %v584
        %v586 = vpop.f32.mrf.mxu0
        %587 = vmatprep.mubr.f32.mxu0 0.0
        %588 = vmatmul.mubr.f32.gmra.mxu0 %v368
        %v589 = vpop.f32.mrf.mxu0
        %v590 = vadd.f32 %v396, %v589
        %v591 = vpop.f32.mrf.mxu0
        %592 = vmatprep.mubr.f32.mxu0 0.0
        %593 = vmatmul.mubr.f32.gmra.mxu0 %v369
        %v594 = vpop.f32.mrf.mxu0
        %v595 = vadd.f32 %v396, %v594
        %v596 = vpop.f32.mrf.mxu0
        %597 = vmatprep.mubr.f32.mxu0 0.0
        %598 = vmatmul.mubr.f32.gmra.mxu0 %v370
        %v599 = vpop.f32.mrf.mxu0
        %v600 = vadd.f32 %v396, %v599
        %v601 = vpop.f32.mrf.mxu0
        %602 = vmatprep.mubr.f32.mxu0 0.0
        %603 = vmatmul.mubr.f32.gmra.mxu0 %v371
        %v604 = vpop.f32.mrf.mxu0
        %v605 = vadd.f32 %v396, %v604
        %v606 = vpop.f32.mrf.mxu0
        %607 = vmatprep.mubr.f32.mxu0 0.0
        %608 = vmatmul.mubr.f32.gmra.mxu0 %v372
        %v609 = vpop.f32.mrf.mxu0
        %v610 = vadd.f32 %v396, %v609
        %v611 = vpop.f32.mrf.mxu0
        %612 = vmatprep.mubr.f32.mxu0 0.0
        %613 = vmatmul.mubr.f32.gmra.mxu0 %v373
        %v614 = vpop.f32.mrf.mxu0
        %v615 = vadd.f32 %v396, %v614
        %v616 = vpop.f32.mrf.mxu0
        %617 = vmatprep.mubr.f32.mxu0 0.0
        %618 = vmatmul.mubr.f32.gmra.mxu0 %v374
        %v619 = vpop.f32.mrf.mxu0
        %v620 = vadd.f32 %v396, %v619
        %v621 = vpop.f32.mrf.mxu0
        %622 = vdwg.mxu0
        %v623 = vld [vmem:[#allocation7] sm:$0xff]
        %v624 = vld [vmem:[#allocation7 + $0x8] sm:$0xff]
        %v625 = vld [vmem:[#allocation7 + $0x10] sm:$0xff]
        %v626 = vld [vmem:[#allocation7 + $0x18] sm:$0xff]
        %v627 = vld [vmem:[#allocation7 + $0x20] sm:$0xff]
        %v628 = vld [vmem:[#allocation7 + $0x28] sm:$0xff]
        %v629 = vld [vmem:[#allocation7 + $0x30] sm:$0xff]
        %v630 = vld [vmem:[#allocation7 + $0x38] sm:$0xff]
        %v631 = vld [vmem:[#allocation7 + $0x40] sm:$0xff]
        %v632 = vld [vmem:[#allocation7 + $0x48] sm:$0xff]
        %v633 = vld [vmem:[#allocation7 + $0x50] sm:$0xff]
        %v634 = vld [vmem:[#allocation7 + $0x58] sm:$0xff]
        %v635 = vld [vmem:[#allocation7 + $0x60] sm:$0xff]
        %v636 = vld [vmem:[#allocation7 + $0x68] sm:$0xff]
        %v637 = vld [vmem:[#allocation7 + $0x70] sm:$0xff]
        %v638 = vld [vmem:[#allocation7 + $0x78] sm:$0xff]
        %v639 = vld [vmem:[%s4] sm:$0x1]
        %v641 = vlaneseq
        %v642 = vshrl.u32 %v641, 7
        %v643 = vsub.s32 0, %v642
        %v644 = vrot.slane %v639, %v643
        %646 = vmatprep.subr.mxu0 0.0
        %647 = vmatpush1.msra.mxu0 %v638
        %648 = vmatprep.subr.mxu0 0.0
        %649 = vmatpush1.msra.mxu0 %v637
        %650 = vmatprep.subr.mxu0 0.0
        %651 = vmatpush1.msra.mxu0 %v636
        %652 = vmatprep.subr.mxu0 0.0
        %653 = vmatpush1.msra.mxu0 %v635
        %654 = vmatprep.subr.mxu0 0.0
        %655 = vmatpush1.msra.mxu0 %v634
        %656 = vmatprep.subr.mxu0 0.0
        %657 = vmatpush1.msra.mxu0 %v633
        %658 = vmatprep.subr.mxu0 0.0
        %659 = vmatpush1.msra.mxu0 %v632
        %660 = vmatprep.subr.mxu0 0.0
        %661 = vmatpush1.msra.mxu0 %v631
        %662 = vmatprep.subr.mxu0 0.0
        %663 = vmatpush1.msra.mxu0 %v630
        %664 = vmatprep.subr.mxu0 0.0
        %665 = vmatpush1.msra.mxu0 %v629
        %666 = vmatprep.subr.mxu0 0.0
        %667 = vmatpush1.msra.mxu0 %v628
        %668 = vmatprep.subr.mxu0 0.0
        %669 = vmatpush1.msra.mxu0 %v627
        %670 = vmatprep.subr.mxu0 0.0
        %671 = vmatpush1.msra.mxu0 %v626
        %672 = vmatprep.subr.mxu0 0.0
        %673 = vmatpush1.msra.mxu0 %v625
        %674 = vmatprep.subr.mxu0 0.0
        %675 = vmatpush1.msra.mxu0 %v624
        %676 = vmatprep.subr.mxu0 0.0
        %677 = vmatpush1.msra.mxu0 %v623
        %678 = vmatprep.subr.mxu0 0.0
        %679 = vmatpush2.msra.mxu0 0.0
        %680 = vmatprep.subr.mxu0 0.0
        %681 = vmatpush2.msra.mxu0 0.0
        %682 = vmatprep.subr.mxu0 0.0
        %683 = vmatpush2.msra.mxu0 0.0
        %684 = vmatprep.subr.mxu0 0.0
        %685 = vmatpush2.msra.mxu0 0.0
        %686 = vmatprep.subr.mxu0 0.0
        %687 = vmatpush2.msra.mxu0 0.0
        %688 = vmatprep.subr.mxu0 0.0
        %689 = vmatpush2.msra.mxu0 0.0
        %690 = vmatprep.subr.mxu0 0.0
        %691 = vmatpush2.msra.mxu0 0.0
        %692 = vmatprep.subr.mxu0 0.0
        %693 = vmatpush2.msra.mxu0 0.0
        %694 = vmatprep.subr.mxu0 0.0
        %695 = vmatpush2.msra.mxu0 0.0
        %696 = vmatprep.subr.mxu0 0.0
        %697 = vmatpush2.msra.mxu0 0.0
        %698 = vmatprep.subr.mxu0 0.0
        %699 = vmatpush2.msra.mxu0 0.0
        %700 = vmatprep.subr.mxu0 0.0
        %701 = vmatpush2.msra.mxu0 0.0
        %702 = vmatprep.subr.mxu0 0.0
        %703 = vmatpush2.msra.mxu0 0.0
        %704 = vmatprep.subr.mxu0 0.0
        %705 = vmatpush2.msra.mxu0 0.0
        %706 = vmatprep.subr.mxu0 0.0
        %707 = vmatpush2.msra.mxu0 0.0
        %708 = vmatprep.subr.mxu0 0.0
        %709 = vmatpush2.msra.mxu0 0.0
        %710 = vmatprep.mubr.f32.mxu0 0.0
        %711 = vmatmul.mubr.f32.gmra.mxu0 %v465
        %v712 = vpop.f32.mrf.mxu0
        %v713 = vadd.f32 %v644, %v712
        %v714 = vpop.f32.mrf.mxu0
        %715 = vmatprep.mubr.f32.mxu0 0.0
        %716 = vmatmul.mubr.f32.gmra.mxu0 %v470
        %v717 = vpop.f32.mrf.mxu0
        %v718 = vadd.f32 %v644, %v717
        %v719 = vpop.f32.mrf.mxu0
        %720 = vmatprep.mubr.f32.mxu0 0.0
        %721 = vmatmul.mubr.f32.gmra.mxu0 %v475
        %v722 = vpop.f32.mrf.mxu0
        %v723 = vadd.f32 %v644, %v722
        %v724 = vpop.f32.mrf.mxu0
        %725 = vmatprep.mubr.f32.mxu0 0.0
        %726 = vmatmul.mubr.f32.gmra.mxu0 %v480
        %v727 = vpop.f32.mrf.mxu0
        %v728 = vadd.f32 %v644, %v727
        %v729 = vpop.f32.mrf.mxu0
        %730 = vmatprep.mubr.f32.mxu0 0.0
        %731 = vmatmul.mubr.f32.gmra.mxu0 %v485
        %v732 = vpop.f32.mrf.mxu0
        %v733 = vadd.f32 %v644, %v732
        %v734 = vpop.f32.mrf.mxu0
        %735 = vmatprep.mubr.f32.mxu0 0.0
        %736 = vmatmul.mubr.f32.gmra.mxu0 %v490
        %v737 = vpop.f32.mrf.mxu0
        %v738 = vadd.f32 %v644, %v737
        %v739 = vpop.f32.mrf.mxu0
        %740 = vmatprep.mubr.f32.mxu0 0.0
        %741 = vmatmul.mubr.f32.gmra.mxu0 %v495
        %v742 = vpop.f32.mrf.mxu0
        %v743 = vadd.f32 %v644, %v742
        %v744 = vpop.f32.mrf.mxu0
        %745 = vmatprep.mubr.f32.mxu0 0.0
        %746 = vmatmul.mubr.f32.gmra.mxu0 %v500
        %v747 = vpop.f32.mrf.mxu0
        %v748 = vadd.f32 %v644, %v747
        %v749 = vpop.f32.mrf.mxu0
        %750 = vmatprep.mubr.f32.mxu0 0.0
        %751 = vmatmul.mubr.f32.gmra.mxu0 %v505
        %v752 = vpop.f32.mrf.mxu0
        %v753 = vadd.f32 %v644, %v752
        %v754 = vpop.f32.mrf.mxu0
        %755 = vmatprep.mubr.f32.mxu0 0.0
        %756 = vmatmul.mubr.f32.gmra.mxu0 %v510
        %v757 = vpop.f32.mrf.mxu0
        %v758 = vadd.f32 %v644, %v757
        %v759 = vpop.f32.mrf.mxu0
        %760 = vmatprep.mubr.f32.mxu0 0.0
        %761 = vmatmul.mubr.f32.gmra.mxu0 %v515
        %v762 = vpop.f32.mrf.mxu0
        %v763 = vadd.f32 %v644, %v762
        %v764 = vpop.f32.mrf.mxu0
        %765 = vmatprep.mubr.f32.mxu0 0.0
        %766 = vmatmul.mubr.f32.gmra.mxu0 %v520
        %v767 = vpop.f32.mrf.mxu0
        %v768 = vadd.f32 %v644, %v767
        %v769 = vpop.f32.mrf.mxu0
        %770 = vmatprep.mubr.f32.mxu0 0.0
        %771 = vmatmul.mubr.f32.gmra.mxu0 %v525
        %v772 = vpop.f32.mrf.mxu0
        %v773 = vadd.f32 %v644, %v772
        %v774 = vpop.f32.mrf.mxu0
        %775 = vmatprep.mubr.f32.mxu0 0.0
        %776 = vmatmul.mubr.f32.gmra.mxu0 %v530
        %v777 = vpop.f32.mrf.mxu0
        %v778 = vadd.f32 %v644, %v777
        %v779 = vpop.f32.mrf.mxu0
        %780 = vmatprep.mubr.f32.mxu0 0.0
        %781 = vmatmul.mubr.f32.gmra.mxu0 %v535
        %v782 = vpop.f32.mrf.mxu0
        %v783 = vadd.f32 %v644, %v782
        %v784 = vpop.f32.mrf.mxu0
        %785 = vmatprep.mubr.f32.mxu0 0.0
        %786 = vmatmul.mubr.f32.gmra.mxu0 %v540
        %v787 = vpop.f32.mrf.mxu0
        %v788 = vadd.f32 %v644, %v787
        %v789 = vpop.f32.mrf.mxu0
        %790 = vmatprep.mubr.f32.mxu0 0.0
        %791 = vmatmul.mubr.f32.gmra.mxu0 %v545
        %v792 = vpop.f32.mrf.mxu0
        %v793 = vadd.f32 %v644, %v792
        %v794 = vpop.f32.mrf.mxu0
        %795 = vmatprep.mubr.f32.mxu0 0.0
        %796 = vmatmul.mubr.f32.gmra.mxu0 %v550
        %v797 = vpop.f32.mrf.mxu0
        %v798 = vadd.f32 %v644, %v797
        %v799 = vpop.f32.mrf.mxu0
        %800 = vmatprep.mubr.f32.mxu0 0.0
        %801 = vmatmul.mubr.f32.gmra.mxu0 %v555
        %v802 = vpop.f32.mrf.mxu0
        %v803 = vadd.f32 %v644, %v802
        %v804 = vpop.f32.mrf.mxu0
        %805 = vmatprep.mubr.f32.mxu0 0.0
        %806 = vmatmul.mubr.f32.gmra.mxu0 %v560
        %v807 = vpop.f32.mrf.mxu0
        %v808 = vadd.f32 %v644, %v807
        %v809 = vpop.f32.mrf.mxu0
        %810 = vmatprep.mubr.f32.mxu0 0.0
        %811 = vmatmul.mubr.f32.gmra.mxu0 %v565
        %v812 = vpop.f32.mrf.mxu0
        %v813 = vadd.f32 %v644, %v812
        %v814 = vpop.f32.mrf.mxu0
        %815 = vmatprep.mubr.f32.mxu0 0.0
        %816 = vmatmul.mubr.f32.gmra.mxu0 %v570
        %v817 = vpop.f32.mrf.mxu0
        %v818 = vadd.f32 %v644, %v817
        %v819 = vpop.f32.mrf.mxu0
        %820 = vmatprep.mubr.f32.mxu0 0.0
        %821 = vmatmul.mubr.f32.gmra.mxu0 %v575
        %v822 = vpop.f32.mrf.mxu0
        %v823 = vadd.f32 %v644, %v822
        %v824 = vpop.f32.mrf.mxu0
        %825 = vmatprep.mubr.f32.mxu0 0.0
        %826 = vmatmul.mubr.f32.gmra.mxu0 %v580
        %v827 = vpop.f32.mrf.mxu0
        %v828 = vadd.f32 %v644, %v827
        %v829 = vpop.f32.mrf.mxu0
        %830 = vmatprep.mubr.f32.mxu0 0.0
        %831 = vmatmul.mubr.f32.gmra.mxu0 %v585
        %v832 = vpop.f32.mrf.mxu0
        %v833 = vadd.f32 %v644, %v832
        %v834 = vpop.f32.mrf.mxu0
        %835 = vmatprep.mubr.f32.mxu0 0.0
        %836 = vmatmul.mubr.f32.gmra.mxu0 %v590
        %v837 = vpop.f32.mrf.mxu0
        %v838 = vadd.f32 %v644, %v837
        %v839 = vpop.f32.mrf.mxu0
        %840 = vmatprep.mubr.f32.mxu0 0.0
        %841 = vmatmul.mubr.f32.gmra.mxu0 %v595
        %v842 = vpop.f32.mrf.mxu0
        %v843 = vadd.f32 %v644, %v842
        %v844 = vpop.f32.mrf.mxu0
        %845 = vmatprep.mubr.f32.mxu0 0.0
        %846 = vmatmul.mubr.f32.gmra.mxu0 %v600
        %v847 = vpop.f32.mrf.mxu0
        %v848 = vadd.f32 %v644, %v847
        %v849 = vpop.f32.mrf.mxu0
        %850 = vmatprep.mubr.f32.mxu0 0.0
        %851 = vmatmul.mubr.f32.gmra.mxu0 %v605
        %v852 = vpop.f32.mrf.mxu0
        %v853 = vadd.f32 %v644, %v852
        %v854 = vpop.f32.mrf.mxu0
        %855 = vmatprep.mubr.f32.mxu0 0.0
        %856 = vmatmul.mubr.f32.gmra.mxu0 %v610
        %v857 = vpop.f32.mrf.mxu0
        %v858 = vadd.f32 %v644, %v857
        %v859 = vpop.f32.mrf.mxu0
        %860 = vmatprep.mubr.f32.mxu0 0.0
        %861 = vmatmul.mubr.f32.gmra.mxu0 %v615
        %v862 = vpop.f32.mrf.mxu0
        %v863 = vadd.f32 %v644, %v862
        %v864 = vpop.f32.mrf.mxu0
        %865 = vmatprep.mubr.f32.mxu0 0.0
        %866 = vmatmul.mubr.f32.gmra.mxu0 %v620
        %v867 = vpop.f32.mrf.mxu0
        %v868 = vadd.f32 %v644, %v867
        %v869 = vpop.f32.mrf.mxu0
        %870 = vdwg.mxu0
        %v871 = vld [vmem:[#allocation8] sm:$0xff]
        %v872 = vld [vmem:[#allocation8 + $0x8] sm:$0xff]
        %v873 = vld [vmem:[#allocation8 + $0x10] sm:$0xff]
        %v874 = vld [vmem:[#allocation8 + $0x18] sm:$0xff]
        %v875 = vld [vmem:[#allocation8 + $0x20] sm:$0xff]
        %v876 = vld [vmem:[#allocation8 + $0x28] sm:$0xff]
        %v877 = vld [vmem:[#allocation8 + $0x30] sm:$0xff]
        %v878 = vld [vmem:[#allocation8 + $0x38] sm:$0xff]
        %v879 = vld [vmem:[#allocation8 + $0x40] sm:$0xff]
        %v880 = vld [vmem:[#allocation8 + $0x48] sm:$0xff]
        %v881 = vld [vmem:[#allocation8 + $0x50] sm:$0xff]
        %v882 = vld [vmem:[#allocation8 + $0x58] sm:$0xff]
        %v883 = vld [vmem:[#allocation8 + $0x60] sm:$0xff]
        %v884 = vld [vmem:[#allocation8 + $0x68] sm:$0xff]
        %v885 = vld [vmem:[#allocation8 + $0x70] sm:$0xff]
        %v886 = vld [vmem:[#allocation8 + $0x78] sm:$0xff]
        %v887 = vld [vmem:[%s6] sm:$0x1]
        %v889 = vlaneseq
        %v890 = vshrl.u32 %v889, 7
        %v891 = vsub.s32 0, %v890
        %v892 = vrot.slane %v887, %v891
        %894 = vmatprep.subr.mxu0 0.0
        %895 = vmatpush1.msra.mxu0 %v886
        %896 = vmatprep.subr.mxu0 0.0
        %897 = vmatpush1.msra.mxu0 %v885
        %898 = vmatprep.subr.mxu0 0.0
        %899 = vmatpush1.msra.mxu0 %v884
        %900 = vmatprep.subr.mxu0 0.0
        %901 = vmatpush1.msra.mxu0 %v883
        %902 = vmatprep.subr.mxu0 0.0
        %903 = vmatpush1.msra.mxu0 %v882
        %904 = vmatprep.subr.mxu0 0.0
        %905 = vmatpush1.msra.mxu0 %v881
        %906 = vmatprep.subr.mxu0 0.0
        %907 = vmatpush1.msra.mxu0 %v880
        %908 = vmatprep.subr.mxu0 0.0
        %909 = vmatpush1.msra.mxu0 %v879
        %910 = vmatprep.subr.mxu0 0.0
        %911 = vmatpush1.msra.mxu0 %v878
        %912 = vmatprep.subr.mxu0 0.0
        %913 = vmatpush1.msra.mxu0 %v877
        %914 = vmatprep.subr.mxu0 0.0
        %915 = vmatpush1.msra.mxu0 %v876
        %916 = vmatprep.subr.mxu0 0.0
        %917 = vmatpush1.msra.mxu0 %v875
        %918 = vmatprep.subr.mxu0 0.0
        %919 = vmatpush1.msra.mxu0 %v874
        %920 = vmatprep.subr.mxu0 0.0
        %921 = vmatpush1.msra.mxu0 %v873
        %922 = vmatprep.subr.mxu0 0.0
        %923 = vmatpush1.msra.mxu0 %v872
        %924 = vmatprep.subr.mxu0 0.0
        %925 = vmatpush1.msra.mxu0 %v871
        %926 = vmatprep.subr.mxu0 0.0
        %927 = vmatpush2.msra.mxu0 0.0
        %928 = vmatprep.subr.mxu0 0.0
        %929 = vmatpush2.msra.mxu0 0.0
        %930 = vmatprep.subr.mxu0 0.0
        %931 = vmatpush2.msra.mxu0 0.0
        %932 = vmatprep.subr.mxu0 0.0
        %933 = vmatpush2.msra.mxu0 0.0
        %934 = vmatprep.subr.mxu0 0.0
        %935 = vmatpush2.msra.mxu0 0.0
        %936 = vmatprep.subr.mxu0 0.0
        %937 = vmatpush2.msra.mxu0 0.0
        %938 = vmatprep.subr.mxu0 0.0
        %939 = vmatpush2.msra.mxu0 0.0
        %940 = vmatprep.subr.mxu0 0.0
        %941 = vmatpush2.msra.mxu0 0.0
        %942 = vmatprep.subr.mxu0 0.0
        %943 = vmatpush2.msra.mxu0 0.0
        %944 = vmatprep.subr.mxu0 0.0
        %945 = vmatpush2.msra.mxu0 0.0
        %946 = vmatprep.subr.mxu0 0.0
        %947 = vmatpush2.msra.mxu0 0.0
        %948 = vmatprep.subr.mxu0 0.0
        %949 = vmatpush2.msra.mxu0 0.0
        %950 = vmatprep.subr.mxu0 0.0
        %951 = vmatpush2.msra.mxu0 0.0
        %952 = vmatprep.subr.mxu0 0.0
        %953 = vmatpush2.msra.mxu0 0.0
        %954 = vmatprep.subr.mxu0 0.0
        %955 = vmatpush2.msra.mxu0 0.0
        %956 = vmatprep.subr.mxu0 0.0
        %957 = vmatpush2.msra.mxu0 0.0
        %958 = vmatprep.mubr.f32.mxu0 0.0
        %959 = vmatmul.mubr.f32.gmra.mxu0 %v713
        %v960 = vpop.f32.mrf.mxu0
        %v961 = vadd.f32 %v892, %v960
        %v962 = vpop.f32.mrf.mxu0
        %963 = vmatprep.mubr.f32.mxu0 0.0
        %964 = vmatmul.mubr.f32.gmra.mxu0 %v718
        %v965 = vpop.f32.mrf.mxu0
        %v966 = vadd.f32 %v892, %v965
        %v967 = vpop.f32.mrf.mxu0
        %968 = vmatprep.mubr.f32.mxu0 0.0
        %969 = vmatmul.mubr.f32.gmra.mxu0 %v723
        %v970 = vpop.f32.mrf.mxu0
        %v971 = vadd.f32 %v892, %v970
        %v972 = vpop.f32.mrf.mxu0
        %973 = vmatprep.mubr.f32.mxu0 0.0
        %974 = vmatmul.mubr.f32.gmra.mxu0 %v728
        %v975 = vpop.f32.mrf.mxu0
        %v976 = vadd.f32 %v892, %v975
        %v977 = vpop.f32.mrf.mxu0
        %978 = vmatprep.mubr.f32.mxu0 0.0
        %979 = vmatmul.mubr.f32.gmra.mxu0 %v733
        %v980 = vpop.f32.mrf.mxu0
        %v981 = vadd.f32 %v892, %v980
        %v982 = vpop.f32.mrf.mxu0
        %983 = vmatprep.mubr.f32.mxu0 0.0
        %984 = vmatmul.mubr.f32.gmra.mxu0 %v738
        %v985 = vpop.f32.mrf.mxu0
        %v986 = vadd.f32 %v892, %v985
        %v987 = vpop.f32.mrf.mxu0
        %988 = vmatprep.mubr.f32.mxu0 0.0
        %989 = vmatmul.mubr.f32.gmra.mxu0 %v743
        %v990 = vpop.f32.mrf.mxu0
        %v991 = vadd.f32 %v892, %v990
        %v992 = vpop.f32.mrf.mxu0
        %993 = vmatprep.mubr.f32.mxu0 0.0
        %994 = vmatmul.mubr.f32.gmra.mxu0 %v748
        %v995 = vpop.f32.mrf.mxu0
        %v996 = vadd.f32 %v892, %v995
        %v997 = vpop.f32.mrf.mxu0
        %998 = vmatprep.mubr.f32.mxu0 0.0
        %999 = vmatmul.mubr.f32.gmra.mxu0 %v753
        %v1000 = vpop.f32.mrf.mxu0
        %v1001 = vadd.f32 %v892, %v1000
        %v1002 = vpop.f32.mrf.mxu0
        %1003 = vmatprep.mubr.f32.mxu0 0.0
        %1004 = vmatmul.mubr.f32.gmra.mxu0 %v758
        %v1005 = vpop.f32.mrf.mxu0
        %v1006 = vadd.f32 %v892, %v1005
        %v1007 = vpop.f32.mrf.mxu0
        %1008 = vmatprep.mubr.f32.mxu0 0.0
        %1009 = vmatmul.mubr.f32.gmra.mxu0 %v763
        %v1010 = vpop.f32.mrf.mxu0
        %v1011 = vadd.f32 %v892, %v1010
        %v1012 = vpop.f32.mrf.mxu0
        %1013 = vmatprep.mubr.f32.mxu0 0.0
        %1014 = vmatmul.mubr.f32.gmra.mxu0 %v768
        %v1015 = vpop.f32.mrf.mxu0
        %v1016 = vadd.f32 %v892, %v1015
        %v1017 = vpop.f32.mrf.mxu0
        %1018 = vmatprep.mubr.f32.mxu0 0.0
        %1019 = vmatmul.mubr.f32.gmra.mxu0 %v773
        %v1020 = vpop.f32.mrf.mxu0
        %v1021 = vadd.f32 %v892, %v1020
        %v1022 = vpop.f32.mrf.mxu0
        %1023 = vmatprep.mubr.f32.mxu0 0.0
        %1024 = vmatmul.mubr.f32.gmra.mxu0 %v778
        %v1025 = vpop.f32.mrf.mxu0
        %v1026 = vadd.f32 %v892, %v1025
        %v1027 = vpop.f32.mrf.mxu0
        %1028 = vmatprep.mubr.f32.mxu0 0.0
        %1029 = vmatmul.mubr.f32.gmra.mxu0 %v783
        %v1030 = vpop.f32.mrf.mxu0
        %v1031 = vadd.f32 %v892, %v1030
        %v1032 = vpop.f32.mrf.mxu0
        %1033 = vmatprep.mubr.f32.mxu0 0.0
        %1034 = vmatmul.mubr.f32.gmra.mxu0 %v788
        %v1035 = vpop.f32.mrf.mxu0
        %v1036 = vadd.f32 %v892, %v1035
        %v1037 = vpop.f32.mrf.mxu0
        %1038 = vmatprep.mubr.f32.mxu0 0.0
        %1039 = vmatmul.mubr.f32.gmra.mxu0 %v793
        %v1040 = vpop.f32.mrf.mxu0
        %v1041 = vadd.f32 %v892, %v1040
        %v1042 = vpop.f32.mrf.mxu0
        %1043 = vmatprep.mubr.f32.mxu0 0.0
        %1044 = vmatmul.mubr.f32.gmra.mxu0 %v798
        %v1045 = vpop.f32.mrf.mxu0
        %v1046 = vadd.f32 %v892, %v1045
        %v1047 = vpop.f32.mrf.mxu0
        %1048 = vmatprep.mubr.f32.mxu0 0.0
        %1049 = vmatmul.mubr.f32.gmra.mxu0 %v803
        %v1050 = vpop.f32.mrf.mxu0
        %v1051 = vadd.f32 %v892, %v1050
        %v1052 = vpop.f32.mrf.mxu0
        %1053 = vmatprep.mubr.f32.mxu0 0.0
        %1054 = vmatmul.mubr.f32.gmra.mxu0 %v808
        %v1055 = vpop.f32.mrf.mxu0
        %v1056 = vadd.f32 %v892, %v1055
        %v1057 = vpop.f32.mrf.mxu0
        %1058 = vmatprep.mubr.f32.mxu0 0.0
        %1059 = vmatmul.mubr.f32.gmra.mxu0 %v813
        %v1060 = vpop.f32.mrf.mxu0
        %v1061 = vadd.f32 %v892, %v1060
        %v1062 = vpop.f32.mrf.mxu0
        %1063 = vmatprep.mubr.f32.mxu0 0.0
        %1064 = vmatmul.mubr.f32.gmra.mxu0 %v818
        %v1065 = vpop.f32.mrf.mxu0
        %v1066 = vadd.f32 %v892, %v1065
        %v1067 = vpop.f32.mrf.mxu0
        %1068 = vmatprep.mubr.f32.mxu0 0.0
        %1069 = vmatmul.mubr.f32.gmra.mxu0 %v823
        %v1070 = vpop.f32.mrf.mxu0
        %v1071 = vadd.f32 %v892, %v1070
        %v1072 = vpop.f32.mrf.mxu0
        %1073 = vmatprep.mubr.f32.mxu0 0.0
        %1074 = vmatmul.mubr.f32.gmra.mxu0 %v828
        %v1075 = vpop.f32.mrf.mxu0
        %v1076 = vadd.f32 %v892, %v1075
        %v1077 = vpop.f32.mrf.mxu0
        %1078 = vmatprep.mubr.f32.mxu0 0.0
        %1079 = vmatmul.mubr.f32.gmra.mxu0 %v833
        %v1080 = vpop.f32.mrf.mxu0
        %v1081 = vadd.f32 %v892, %v1080
        %v1082 = vpop.f32.mrf.mxu0
        %1083 = vmatprep.mubr.f32.mxu0 0.0
        %1084 = vmatmul.mubr.f32.gmra.mxu0 %v838
        %v1085 = vpop.f32.mrf.mxu0
        %v1086 = vadd.f32 %v892, %v1085
        %v1087 = vpop.f32.mrf.mxu0
        %1088 = vmatprep.mubr.f32.mxu0 0.0
        %1089 = vmatmul.mubr.f32.gmra.mxu0 %v843
        %v1090 = vpop.f32.mrf.mxu0
        %v1091 = vadd.f32 %v892, %v1090
        %v1092 = vpop.f32.mrf.mxu0
        %1093 = vmatprep.mubr.f32.mxu0 0.0
        %1094 = vmatmul.mubr.f32.gmra.mxu0 %v848
        %v1095 = vpop.f32.mrf.mxu0
        %v1096 = vadd.f32 %v892, %v1095
        %v1097 = vpop.f32.mrf.mxu0
        %1098 = vmatprep.mubr.f32.mxu0 0.0
        %1099 = vmatmul.mubr.f32.gmra.mxu0 %v853
        %v1100 = vpop.f32.mrf.mxu0
        %v1101 = vadd.f32 %v892, %v1100
        %v1102 = vpop.f32.mrf.mxu0
        %1103 = vmatprep.mubr.f32.mxu0 0.0
        %1104 = vmatmul.mubr.f32.gmra.mxu0 %v858
        %v1105 = vpop.f32.mrf.mxu0
        %v1106 = vadd.f32 %v892, %v1105
        %v1107 = vpop.f32.mrf.mxu0
        %1108 = vmatprep.mubr.f32.mxu0 0.0
        %1109 = vmatmul.mubr.f32.gmra.mxu0 %v863
        %v1110 = vpop.f32.mrf.mxu0
        %v1111 = vadd.f32 %v892, %v1110
        %v1112 = vpop.f32.mrf.mxu0
        %1113 = vmatprep.mubr.f32.mxu0 0.0
        %1114 = vmatmul.mubr.f32.gmra.mxu0 %v868
        %v1115 = vpop.f32.mrf.mxu0
        %v1116 = vadd.f32 %v892, %v1115
        %v1117 = vpop.f32.mrf.mxu0
        %1118 = vdwg.mxu0
        %1119 = vst [vmem:[%s340] sm:$0xff] %v961
        %1120 = vst [vmem:[%s340 + $0x8] sm:$0xff] %v966
        %1121 = vst [vmem:[%s340 + $0x10] sm:$0xff] %v971
        %1122 = vst [vmem:[%s340 + $0x18] sm:$0xff] %v976
        %1123 = vst [vmem:[%s340 + $0x20] sm:$0xff] %v981
        %1124 = vst [vmem:[%s340 + $0x28] sm:$0xff] %v986
        %1125 = vst [vmem:[%s340 + $0x30] sm:$0xff] %v991
        %1126 = vst [vmem:[%s340 + $0x38] sm:$0xff] %v996
        %1127 = vst [vmem:[%s340 + $0x40] sm:$0xff] %v1001
        %1128 = vst [vmem:[%s340 + $0x48] sm:$0xff] %v1006
        %1129 = vst [vmem:[%s340 + $0x50] sm:$0xff] %v1011
        %1130 = vst [vmem:[%s340 + $0x58] sm:$0xff] %v1016
        %1131 = vst [vmem:[%s340 + $0x60] sm:$0xff] %v1021
        %1132 = vst [vmem:[%s340 + $0x68] sm:$0xff] %v1026
        %1133 = vst [vmem:[%s340 + $0x70] sm:$0xff] %v1031
        %1134 = vst [vmem:[%s340 + $0x78] sm:$0xff] %v1036
        %1135 = vst [vmem:[%s340 + $0x80] sm:$0xff] %v1041
        %1136 = vst [vmem:[%s340 + $0x88] sm:$0xff] %v1046
        %1137 = vst [vmem:[%s340 + $0x90] sm:$0xff] %v1051
        %1138 = vst [vmem:[%s340 + $0x98] sm:$0xff] %v1056
        %1139 = vst [vmem:[%s340 + $0xa0] sm:$0xff] %v1061
        %1140 = vst [vmem:[%s340 + $0xa8] sm:$0xff] %v1066
        %1141 = vst [vmem:[%s340 + $0xb0] sm:$0xff] %v1071
        %1142 = vst [vmem:[%s340 + $0xb8] sm:$0xff] %v1076
        %1143 = vst [vmem:[%s340 + $0xc0] sm:$0xff] %v1081
        %1144 = vst [vmem:[%s340 + $0xc8] sm:$0xff] %v1086
        %1145 = vst [vmem:[%s340 + $0xd0] sm:$0xff] %v1091
        %1146 = vst [vmem:[%s340 + $0xd8] sm:$0xff] %v1096
        %1147 = vst [vmem:[%s340 + $0xe0] sm:$0xff] %v1101
        %1148 = vst [vmem:[%s340 + $0xe8] sm:$0xff] %v1106
        %1149 = vst [vmem:[%s340 + $0xf0] sm:$0xff] %v1111
        %1150 = vst [vmem:[%s340 + $0xf8] sm:$0xff] %v1116
        %s1151 = sand.u32 %s186, 1
        %s1152 = scalar_lea.sflag [#allocation4], %s1151
        %s1153 = sand.u32 %s186, 1
        %s1154 = smul.addr %s1153, 256
        %s1155 = scalar_lea.vmem [#allocation10], %s1154
        // Predicated region
        $region65: #{tpu_custom_call.1} parent=47 // pred_check
          %p1156 = pneg %p196
        $region66: #{tpu_custom_call.1} parent=47 // pred_check_branch
          %1158 = sbr.rel (%p1156) target = $region68
        $region67: #{tpu_custom_call.1} parent=47 // pred_region
          %s1159 = smul.u32 32, %s26
          %s1161 = ssub.s32 4096, 4096
          %1162 = vsyncadd %s1152, %s1161
          %s1163 = smul.addr %s1159, 128
          %s1164 = scalar_lea.hbm %s7, %s1163
          %s1165 = sshll.u32 %s1155, 4
          %s1166 = int_to_ptr.vmem [resolvable:$true] %s1165
          %1171 = dma.vmem_to_hbm [thread:$0]  %s1166, 4096, %s1164, %s1152, 128, 128, 8
        $region68: #{tpu_custom_call.1} parent=47 // pred_fallthru
          _
      $region48: #{tpu_custom_call.1} parent=5 // pred_fallthru
        _
      %p1172 = scmp.le.s32.totalorder 2, %s21
      // Predicated region
      $region69: #{tpu_custom_call.1} parent=5 // pred_check
        %p1173 = pneg %p1172
      $region70: #{tpu_custom_call.1} parent=5 // pred_check_branch
        %1175 = sbr.rel (%p1173) target = $region72
      $region71: #{tpu_custom_call.1} parent=5 // pred_region
        %s1176 = ssub.s32 %s21, 2
        // Predicated region
        $region73: #{tpu_custom_call.1} parent=71 // pred_check
          %p1177 = pneg %p202
        $region74: #{tpu_custom_call.1} parent=71 // pred_check_branch
          %1179 = sbr.rel (%p1177) target = $region76
        $region75: #{tpu_custom_call.1} parent=71 // pred_region
          %s1180 = sand.u32 %s187, 1
          %s1181 = scalar_lea.sflag [#allocation4], %s1180
          %s1182 = sand.u32 %s187, 1
          %s1183 = smul.addr %s1182, 256
          %s1184 = scalar_lea.vmem [#allocation10], %s1183
          %1185 = dma.done %s1181, 4096
        $region76: #{tpu_custom_call.1} parent=71 // pred_fallthru
          _
      $region72: #{tpu_custom_call.1} parent=5 // pred_fallthru
        _
    $region6: #{tpu_custom_call.1} parent=1 // loop_footer
      %s25 = sadd.s32 1, %s21
    $region7: #{tpu_custom_call.1} parent=1 // loop_footer_branch
      %20 = sbr.rel target = $region3
    $region8: #{tpu_custom_call.1} parent=1 // loop_exit
      _
    %1186 = vsyncpa [#allocation3], 1
    %s1187 = scalar_lea.sflag [#allocation3], 1
    %1188 = vsyncpa %s1187, 1
    %1189 = vsyncpa [#allocation6], 1
    %1190 = vsyncpa [#allocation9], 1
    %1191 = vsyncpa [#allocation4], 1
    %s1192 = scalar_lea.sflag [#allocation4], 1
    %1193 = vsyncpa %s1192, 1

</llo_original>
